<compile_context>
chip_gen: v7x
topology: tpu7x:2x2x1
jax: 0.10.0
libtpu: 0.0.40
codegen_flags: <defaults>
</compile_context>

<pallas_src>
import numpy as np
import jax
import jax.numpy as jnp
from jax.experimental import pallas as pl
from jax.experimental.pallas import tpu as pltpu


def pap_kernel(xcat_ref, nb_ref, w1_ref, wn_ref, bn_ref, wc_ref, wa_ref,
               out_ref, coarse_ref, cnt_ref, coarse_wc_ref):
    """Grid = (phase, node_tile). phase 0: per-batch sums + counts; phase 1: attention + pool."""
    phase = pl.program_id(0)
    t = pl.program_id(1)
    n_tiles = pl.num_programs(1)
    tile_n = xcat_ref.shape[0]
    b_pad = coarse_ref.shape[0]

    @pl.when((phase == 0) & (t == 0))
    def _init():
        coarse_ref[...] = jnp.zeros_like(coarse_ref)
        cnt_ref[...] = jnp.zeros_like(cnt_ref)
        out_ref[...] = jnp.zeros_like(out_ref)

    # Fused "linear + bias + positional concat" for both node types:
    # xcat rows are [xp | xq | 1{prod} | 1{query} | pos]; W1 is the augmented
    # block-diagonal weight, so node_emb == tanh(concat([lin(x), pos_emb], axis=1)).
    node_emb_f32 = jnp.tanh(
        jnp.dot(xcat_ref[...], w1_ref[...], preferred_element_type=jnp.float32))
    # Single bf16 cast, reused by every MXU consumer below.
    node_emb = node_emb_f32.astype(jnp.bfloat16)

    # Transposed one-hot segment matrix built in-registers from the int32 batch ids.
    # Padded rows carry batch id -1 and therefore contribute nothing anywhere.
    segT = (jax.lax.broadcasted_iota(jnp.int32, (tile_n, b_pad), 1)
            == nb_ref[...]).astype(jnp.float32)                        # [tile_n, B_pad]

    @pl.when(phase == 0)
    def _accumulate_coarse():
        # global_mean_pool numerator: contract the node axis directly (transposed LHS).
        # bf16 operands (segT is exactly representable), f32 accumulate.
        coarse_ref[...] += jax.lax.dot_general(
            segT.astype(jnp.bfloat16), node_emb,
            dimension_numbers=(((0,), (0,)), ((), ())),
            preferred_element_type=jnp.float32)
        cnt_ref[...] += jnp.sum(segT, axis=0, keepdims=True)           # [1, B_pad]

        @pl.when(t == n_tiles - 1)
        def _finalize_inverse_counts():
            # Exact reciprocal: runs once on a [1, B_pad] vector (approx saves nothing).
            c = cnt_ref[...]
            cnt_ref[...] = jnp.where(c > 0.0, 1.0 / c, jnp.zeros_like(c))

    @pl.when(phase == 1)
    def _attend_and_pool():
        @pl.when(t == 0)
        def _precompute_coarse_wc():
            # Reassociated coarse-attention term: (segT_mean @ coarse) @ wcT
            # == segT_mean @ (coarse @ wcT).  Done once per call, kept resident.
            coarse_wc_ref[...] = jnp.dot(coarse_ref[...], wc_ref[...],
                                         preferred_element_type=jnp.float32)

        inv = cnt_ref[...]                       # [1, B_pad] holds 1/count (0 if empty)
        segT_mean = segT * inv                   # fold the mean normalization in
        a = jnp.dot(node_emb, wn_ref[...],
                    preferred_element_type=jnp.float32) + bn_ref[...]
        # Gather-by-matmul with tiny K = B_pad; f32 keeps the 1/count factor exact here.
        b = jnp.dot(segT_mean, coarse_wc_ref[...],
                    preferred_element_type=jnp.float32)
        # att_lin has a single output column -> VPU multiply + lane reduce
        # instead of a 1-wide MXU matmul.
        att = jnp.sum(jax.nn.sigmoid(a + b) * wa_ref[...], axis=-1, keepdims=True)
        # Fold attention and 1/count into the segment matrix; finish the weighted
        # mean pool with one bf16 MXU contraction over the node axis (f32 accumulate).
        out_ref[...] += jax.lax.dot_general(
            (segT_mean * att).astype(jnp.bfloat16), node_emb,
            dimension_numbers=(((0,), (0,)), ((), ())),
            preferred_element_type=jnp.float32)


def positional_attention_pooling(xq, posq, xp_rep, posp, node_batch, num_batches,
                                 params, *, tile_n=2048):
    """Returns [num_batches, num_out] pooled representation (matches the PyTorch module)."""
    f32, bf16 = jnp.float32, jnp.bfloat16
    Nq, Dq = xq.shape
    Np, Dp = xp_rep.shape
    L = posq.shape[1]
    d_lin = params["wq"].shape[0]
    num_out = d_lin + L
    B = int(num_batches)
    B_pad = max(8, ((B + 7) // 8) * 8)            # sublane-clean resident accumulators
    F_pad = ((num_out + 127) // 128) * 128        # lane-dense feature width
    Daug = Dp + Dq + 2 + L                        # [xp | xq | bias flags | pos]
    N = Np + Nq

    # ---- layout plumbing (JAX): augmented node features built once ----
    xcat_p = jnp.concatenate(
        [xp_rep.astype(f32), jnp.zeros((Np, Dq), f32),
         jnp.ones((Np, 1), f32), jnp.zeros((Np, 1), f32), posp.astype(f32)], axis=1)
    xcat_q = jnp.concatenate(
        [jnp.zeros((Nq, Dp), f32), xq.astype(f32),
         jnp.zeros((Nq, 1), f32), jnp.ones((Nq, 1), f32), posq.astype(f32)], axis=1)
    xcat = jnp.concatenate([xcat_p, xcat_q], axis=0)                  # [N, Daug]

    # tile_n: multiple of 256 (fills 256-row MXU on v6e/v7x; bf16 (16,128) packing),
    # clamped to the padded node count so tiny graphs stay single-tile.
    tile_n = max(256, ((int(tile_n) + 255) // 256) * 256)
    tile_n = min(tile_n, ((max(N, 1) + 255) // 256) * 256)
    n_tiles = pl.cdiv(N, tile_n)
    N_pad = n_tiles * tile_n
    xcat = jnp.pad(xcat, ((0, N_pad - N), (0, 0)))
    nb = jnp.pad(node_batch.astype(jnp.int32), (0, N_pad - N),
                 constant_values=-1).reshape(N_pad, 1)                # pad rows -> no batch

    # ---- augmented / lane-padded weights ----
    w1 = jnp.zeros((Daug, F_pad), f32)
    w1 = w1.at[0:Dp, 0:d_lin].set(params["wp"].T)
    w1 = w1.at[Dp:Dp + Dq, 0:d_lin].set(params["wq"].T)
    w1 = w1.at[Dp + Dq, 0:d_lin].set(params["bp"])
    w1 = w1.at[Dp + Dq + 1, 0:d_lin].set(params["bq"])
    w1 = w1.at[Dp + Dq + 2:Daug, d_lin:num_out].set(jnp.eye(L, dtype=f32))
    wnT = jnp.zeros((F_pad, F_pad), f32).at[:num_out, :num_out].set(params["wn"].T)
    wcT = jnp.zeros((F_pad, F_pad), f32).at[:num_out, :num_out].set(params["wc"].T)
    bn = jnp.zeros((1, F_pad), f32).at[0, :num_out].set(params["bn"])
    wa = jnp.zeros((1, F_pad), f32).at[0, :num_out].set(params["wa"][0])

    # wcT stays f32: it is consumed exactly once (coarse_wc precompute).
    args = (xcat.astype(bf16), nb, w1.astype(bf16), wnT.astype(bf16), bn, wcT, wa)

    out = pl.pallas_call(
        pap_kernel,
        out_shape=jax.ShapeDtypeStruct((B_pad, F_pad), f32),
        grid_spec=pltpu.PrefetchScalarGridSpec(
            num_scalar_prefetch=0,
            grid=(2, n_tiles),                                    # (phase, node tile)
            in_specs=[
                pl.BlockSpec((tile_n, Daug), lambda p, t: (t, 0)),   # streamed features
                pl.BlockSpec((tile_n, 1), lambda p, t: (t, 0)),      # streamed batch ids
                pl.BlockSpec((Daug, F_pad), lambda p, t: (0, 0)),    # resident weights
                pl.BlockSpec((F_pad, F_pad), lambda p, t: (0, 0)),
                pl.BlockSpec((1, F_pad), lambda p, t: (0, 0)),
                pl.BlockSpec((F_pad, F_pad), lambda p, t: (0, 0)),
                pl.BlockSpec((1, F_pad), lambda p, t: (0, 0)),
            ],
            out_specs=pl.BlockSpec((B_pad, F_pad), lambda p, t: (0, 0)),  # resident accumulator
            scratch_shapes=[pltpu.VMEM((B_pad, F_pad), f32),   # coarse per-batch sums
                            pltpu.VMEM((1, B_pad), f32),       # counts -> 1/count
                            pltpu.VMEM((B_pad, F_pad), f32)],  # coarse @ wcT (phase 1)
        ),
        compiler_params=pltpu.CompilerParams(
            dimension_semantics=("arbitrary", "arbitrary"),
            vmem_limit_bytes=48 * 1024 * 1024),
    )(*args)
    return out[:B, :num_out]


def reference(xq, xp_orig, cnt, q_pos_id, p_pos_id, q_batch, p_batch, B, params):
    """Pure-JAX replica of the PyTorch forward (PyTorch op order, f32)."""
    pos_w = params["pos"]
    query_emb = xq @ params["wq"].T + params["bq"]
    product_emb = xp_orig @ params["wp"].T + params["bp"]
    query_pos = pos_w[q_pos_id]
    query_emb = jnp.tanh(jnp.concatenate([query_emb, query_pos], axis=1))
    rep_idx = np.repeat(np.arange(xp_orig.shape[0]), np.asarray(cnt))
    product_emb = product_emb[rep_idx]
    product_pos = pos_w[p_pos_id]
    product_emb = jnp.tanh(jnp.concatenate([product_emb, product_pos], axis=1))
    product_batch = jnp.asarray(np.asarray(p_batch)[rep_idx])
    node_emb = jnp.concatenate([product_emb, query_emb], axis=0)
    node_batch = jnp.concatenate([product_batch, q_batch], axis=0)

    def mean_pool(x, idx):
        sums = jax.ops.segment_sum(x, idx, num_segments=B)
        counts = jax.ops.segment_sum(jnp.ones((x.shape[0], 1)), idx, num_segments=B)
        return sums / counts

    coarse = mean_pool(node_emb, node_batch)
    coarse = coarse[node_batch]
    a = node_emb @ params["wn"].T + params["bn"]
    b = coarse @ params["wc"].T
    att = jax.nn.sigmoid(a + b) @ params["wa"].T
    return mean_pool(node_emb * att, node_batch)


if __name__ == "__main__":
    # --- module hyper-parameters ---
    query_in, product_in = 16, 16
    max_seq_len = 8
    num_out = 40                      # num_out - max_seq_len = 32 (Linear output dim)
    d_lin = num_out - max_seq_len

    # --- deterministic parameters (synthetic; mirrors __init__ shapes) ---
    key = jax.random.PRNGKey(0)
    ks = jax.random.split(key, 12)
    params = {
        "wq": 0.1 * jax.random.normal(ks[0], (d_lin, query_in), jnp.float32),
        "bq": 0.1 * jax.random.normal(ks[1], (d_lin,), jnp.float32),
        "wp": 0.1 * jax.random.normal(ks[2], (d_lin, product_in), jnp.float32),
        "bp": 0.1 * jax.random.normal(ks[3], (d_lin,), jnp.float32),
        "pos": 0.1 * jax.random.normal(ks[4], (max_seq_len, max_seq_len), jnp.float32),
        "wn": 0.1 * jax.random.normal(ks[5], (num_out, num_out), jnp.float32),
        "bn": 0.1 * jax.random.normal(ks[6], (num_out,), jnp.float32),
        "wc": 0.1 * jax.random.normal(ks[7], (num_out, num_out), jnp.float32),
        "wa": 0.1 * jax.random.normal(ks[8], (1, num_out), jnp.float32),
    }

    # --- deterministic synthetic graph data (big enough to exercise multi-tile + padding) ---
    B = 3
    Nq = 193                                            # query nodes
    Np_orig = 120                                       # original products
    cnt = (np.arange(Np_orig) % 4 + 1).astype(np.int32) # repeat_interleave counts, sum = 300
    Np = int(cnt.sum())                                 # repeated product nodes = 300

    xq = jax.random.normal(ks[9], (Nq, query_in), jnp.float32)
    xp_orig = jax.random.normal(ks[10], (Np_orig, product_in), jnp.float32)
    q_pos_id = (np.arange(Nq) % max_seq_len).astype(np.int32)             # len Nq
    p_pos_id = ((np.arange(Np) * 3) % max_seq_len).astype(np.int32)       # len Np (post-repeat)
    q_batch = (np.arange(Nq) % B).astype(np.int32)                        # len Nq
    p_batch = (np.arange(Np_orig) % B).astype(np.int32)                   # len Np_orig

    # --- glue (outside the kernel): repeat, embedding gather, node_batch ---
    rep_idx = np.repeat(np.arange(Np_orig), cnt)
    xp_rep = jnp.asarray(np.asarray(xp_orig)[rep_idx])            # [Np, product_in]
    posq = params["pos"][jnp.asarray(q_pos_id)]                   # [Nq, max_seq_len]
    posp = params["pos"][jnp.asarray(p_pos_id)]                   # [Np, max_seq_len]
    node_batch = jnp.asarray(np.concatenate([p_batch[rep_idx], q_batch]).astype(np.int32))

    # N = 493 nodes, tile_n=256 -> 2 node tiles (exercises multi-tile grid + row padding).
    out = positional_attention_pooling(
        jnp.asarray(xq), posq, xp_rep, posp, node_batch, B, params, tile_n=256)
    out = jax.block_until_ready(out)

    ref = reference(jnp.asarray(xq), jnp.asarray(xp_orig), cnt,
                    jnp.asarray(q_pos_id), jnp.asarray(p_pos_id),
                    jnp.asarray(q_batch), jnp.asarray(p_batch), B, params)
    # bf16 MXU operands (incl. the att*1/count-folded segment matrix) -> looser tol than f32.
    np.testing.assert_allclose(np.asarray(out), np.asarray(ref), rtol=2e-2, atol=2e-2)

    print("KERNEL_OK")
</pallas_src>

<mosaic_0001>
module attributes {stable_mosaic.version = 11 : i64} {
  func.func @pap_kernel(%arg0: i32, %arg1: i32, %arg2: memref<256x42xbf16, #tpu.memory_space<vmem>>, %arg3: memref<256x1xi32, #tpu.memory_space<vmem>>, %arg4: memref<42x128xbf16, #tpu.memory_space<vmem>>, %arg5: memref<128x128xbf16, #tpu.memory_space<vmem>>, %arg6: memref<1x128xf32, #tpu.memory_space<vmem>>, %arg7: memref<128x128xf32, #tpu.memory_space<vmem>>, %arg8: memref<1x128xf32, #tpu.memory_space<vmem>>, %arg9: memref<8x128xf32, #tpu.memory_space<vmem>>, %arg10: memref<8x128xf32, #tpu.memory_space<vmem>>, %arg11: memref<1x8xf32, #tpu.memory_space<vmem>>, %arg12: memref<8x128xf32, #tpu.memory_space<vmem>>) attributes {dimension_semantics = [#tpu.dimension_semantics<arbitrary>, #tpu.dimension_semantics<arbitrary>], iteration_bounds = array<i64: 2, 2>, scalar_prefetch = 0 : i64, scratch_operands = 3 : i64, tpu.core_type = #tpu.core_type<tc>, window_params = [{transform_indices = @transform_0, window_bounds = array<i64: 256, 42>}, {transform_indices = @transform_1, window_bounds = array<i64: 256, 1>}, {pipeline_mode = #tpu.pipeline_mode<synchronous>, transform_indices = @transform_2, window_bounds = array<i64: 42, 128>}, {pipeline_mode = #tpu.pipeline_mode<synchronous>, transform_indices = @transform_3, window_bounds = array<i64: 128, 128>}, {pipeline_mode = #tpu.pipeline_mode<synchronous>, transform_indices = @transform_4, window_bounds = array<i64: 1, 128>}, {pipeline_mode = #tpu.pipeline_mode<synchronous>, transform_indices = @transform_5, window_bounds = array<i64: 128, 128>}, {pipeline_mode = #tpu.pipeline_mode<synchronous>, transform_indices = @transform_6, window_bounds = array<i64: 1, 128>}, {pipeline_mode = #tpu.pipeline_mode<synchronous>, transform_indices = @transform_7, window_bounds = array<i64: 8, 128>}]} {
    %c0_i32 = arith.constant 0 : i32
    %0 = arith.cmpi eq, %arg0, %c0_i32 : i32
    %c0_i32_0 = arith.constant 0 : i32
    %1 = arith.cmpi eq, %arg1, %c0_i32_0 : i32
    %2 = arith.andi %0, %1 : i1
    %3 = arith.extui %2 : i1 to i32
    %c0_i32_1 = arith.constant 0 : i32
    %4 = arith.cmpi ne, %3, %c0_i32_1 : i32
    scf.if %4 {
      %cst_10 = arith.constant 0.000000e+00 : f32
      %22 = vector.broadcast %cst_10 : f32 to vector<8x128xf32>
      %c0_11 = arith.constant 0 : index
      %c0_12 = arith.constant 0 : index
      %23 = vector.load %arg10[%c0_11, %c0_12] : memref<8x128xf32, #tpu.memory_space<vmem>>, vector<8x128xf32>
      tpu.vector_store %arg10[%c0_11, %c0_12], %22 {strides = array<i32>} : memref<8x128xf32, #tpu.memory_space<vmem>>, vector<8x128xf32>,
      %cst_13 = arith.constant 0.000000e+00 : f32
      %24 = vector.broadcast %cst_13 : f32 to vector<1x8xf32>
      %c0_14 = arith.constant 0 : index
      %c0_15 = arith.constant 0 : index
      %25 = vector.load %arg11[%c0_14, %c0_15] : memref<1x8xf32, #tpu.memory_space<vmem>>, vector<1x8xf32>
      tpu.vector_store %arg11[%c0_14, %c0_15], %24 {strides = array<i32>} : memref<1x8xf32, #tpu.memory_space<vmem>>, vector<1x8xf32>,
      %cst_16 = arith.constant 0.000000e+00 : f32
      %26 = vector.broadcast %cst_16 : f32 to vector<8x128xf32>
      %c0_17 = arith.constant 0 : index
      %c0_18 = arith.constant 0 : index
      %27 = vector.load %arg9[%c0_17, %c0_18] : memref<8x128xf32, #tpu.memory_space<vmem>>, vector<8x128xf32>
      tpu.vector_store %arg9[%c0_17, %c0_18], %26 {strides = array<i32>} : memref<8x128xf32, #tpu.memory_space<vmem>>, vector<8x128xf32>,
    } else {
    }
    %c0 = arith.constant 0 : index
    %c0_2 = arith.constant 0 : index
    %5 = vector.load %arg2[%c0, %c0_2] : memref<256x42xbf16, #tpu.memory_space<vmem>>, vector<256x42xbf16>
    %c0_3 = arith.constant 0 : index
    %c0_4 = arith.constant 0 : index
    %6 = vector.load %arg4[%c0_3, %c0_4] : memref<42x128xbf16, #tpu.memory_space<vmem>>, vector<42x128xbf16>
    %cst = arith.constant dense<0.000000e+00> : vector<256x128xf32>
    %7 = tpu.matmul %5, %6, %cst {dimension_numbers = #tpu.dot_dimension_numbers<[1], [0], [0], [1], [0, 0, 1, 1], [], []>} : vector<256x42xbf16>, vector<42x128xbf16>, vector<256x128xf32> -> vector<256x128xf32>
    %8 = math.tanh %7 : vector<256x128xf32>
    %9 = arith.truncf %8 : vector<256x128xf32> to vector<256x128xbf16>
    %10 = tpu.iota {dimensions = array<i32: 1>} : vector<256x8xi32>
    %c0_5 = arith.constant 0 : index
    %c0_6 = arith.constant 0 : index
    %11 = vector.load %arg3[%c0_5, %c0_6] : memref<256x1xi32, #tpu.memory_space<vmem>>, vector<256x1xi32>
    %12 = vector.broadcast %11 : vector<256x1xi32> to vector<256x8xi32>
    %13 = arith.cmpi eq, %10, %12 : vector<256x8xi32>
    %14 = arith.extui %13 : vector<256x8xi1> to vector<256x8xi32>
    %15 = arith.sitofp %14 : vector<256x8xi32> to vector<256x8xf32>
    %c0_i32_7 = arith.constant 0 : i32
    %16 = arith.cmpi eq, %arg0, %c0_i32_7 : i32
    %17 = arith.extui %16 : i1 to i32
    %c0_i32_8 = arith.constant 0 : i32
    %18 = arith.cmpi ne, %17, %c0_i32_8 : i32
    scf.if %18 {
      %c0_10 = arith.constant 0 : index
      %c0_11 = arith.constant 0 : index
      %22 = vector.load %arg10[%c0_10, %c0_11] : memref<8x128xf32, #tpu.memory_space<vmem>>, vector<8x128xf32>
      %23 = arith.truncf %15 : vector<256x8xf32> to vector<256x8xbf16>
      %cst_12 = arith.constant dense<0.000000e+00> : vector<8x128xf32>
      %24 = tpu.matmul %23, %9, %cst_12 {dimension_numbers = #tpu.dot_dimension_numbers<[0], [0], [1], [1], [0, 1, 1, 1], [], []>} : vector<256x8xbf16>, vector<256x128xbf16>, vector<8x128xf32> -> vector<8x128xf32>
      %25 = arith.addf %22, %24 : vector<8x128xf32>
      %c0_13 = arith.constant 0 : index
      %c0_14 = arith.constant 0 : index
      %26 = vector.load %arg10[%c0_13, %c0_14] : memref<8x128xf32, #tpu.memory_space<vmem>>, vector<8x128xf32>
      tpu.vector_store %arg10[%c0_13, %c0_14], %25 {strides = array<i32>} : memref<8x128xf32, #tpu.memory_space<vmem>>, vector<8x128xf32>,
      %c0_15 = arith.constant 0 : index
      %c0_16 = arith.constant 0 : index
      %27 = vector.load %arg11[%c0_15, %c0_16] : memref<1x8xf32, #tpu.memory_space<vmem>>, vector<1x8xf32>
      %cst_17 = arith.constant dense<0.000000e+00> : vector<8xf32>
      %28 = vector.multi_reduction <add>, %15, %cst_17 [0] : vector<256x8xf32> to vector<8xf32>
      %29 = vector.shape_cast %28 : vector<8xf32> to vector<1x8xf32>
      %30 = arith.addf %27, %29 : vector<1x8xf32>
      %c0_18 = arith.constant 0 : index
      %c0_19 = arith.constant 0 : index
      %31 = vector.load %arg11[%c0_18, %c0_19] : memref<1x8xf32, #tpu.memory_space<vmem>>, vector<1x8xf32>
      tpu.vector_store %arg11[%c0_18, %c0_19], %30 {strides = array<i32>} : memref<1x8xf32, #tpu.memory_space<vmem>>, vector<1x8xf32>,
      %c1_i32_20 = arith.constant 1 : i32
      %32 = arith.cmpi eq, %arg1, %c1_i32_20 : i32
      %33 = arith.extui %32 : i1 to i32
      %c0_i32_21 = arith.constant 0 : i32
      %34 = arith.cmpi ne, %33, %c0_i32_21 : i32
      scf.if %34 {
        %c0_22 = arith.constant 0 : index
        %c0_23 = arith.constant 0 : index
        %35 = vector.load %arg11[%c0_22, %c0_23] : memref<1x8xf32, #tpu.memory_space<vmem>>, vector<1x8xf32>
        %cst_24 = arith.constant 0.000000e+00 : f32
        %36 = vector.broadcast %cst_24 : f32 to vector<1x8xf32>
        %37 = arith.cmpf ogt, %35, %36 : vector<1x8xf32>
        %cst_25 = arith.constant 1.000000e+00 : f32
        %38 = vector.broadcast %cst_25 : f32 to vector<1x8xf32>
        %39 = arith.divf %38, %35 : vector<1x8xf32>
        %cst_26 = arith.constant 0.000000e+00 : f32
        %40 = vector.broadcast %cst_26 : f32 to vector<1x8xf32>
        %41 = arith.select %37, %39, %40 : vector<1x8xi1>, vector<1x8xf32>
        %c0_27 = arith.constant 0 : index
        %c0_28 = arith.constant 0 : index
        %42 = vector.load %arg11[%c0_27, %c0_28] : memref<1x8xf32, #tpu.memory_space<vmem>>, vector<1x8xf32>
        tpu.vector_store %arg11[%c0_27, %c0_28], %41 {strides = array<i32>} : memref<1x8xf32, #tpu.memory_space<vmem>>, vector<1x8xf32>,
      } else {
      }
    } else {
    }
    %c1_i32 = arith.constant 1 : i32
    %19 = arith.cmpi eq, %arg0, %c1_i32 : i32
    %20 = arith.extui %19 : i1 to i32
    %c0_i32_9 = arith.constant 0 : i32
    %21 = arith.cmpi ne, %20, %c0_i32_9 : i32
    scf.if %21 {
      %c0_i32_10 = arith.constant 0 : i32
      %22 = arith.cmpi eq, %arg1, %c0_i32_10 : i32
      %23 = arith.extui %22 : i1 to i32
      %c0_i32_11 = arith.constant 0 : i32
      %24 = arith.cmpi ne, %23, %c0_i32_11 : i32
      scf.if %24 {
        %c0_31 = arith.constant 0 : index
        %c0_32 = arith.constant 0 : index
        %53 = vector.load %arg10[%c0_31, %c0_32] : memref<8x128xf32, #tpu.memory_space<vmem>>, vector<8x128xf32>
        %c0_33 = arith.constant 0 : index
        %c0_34 = arith.constant 0 : index
        %54 = vector.load %arg7[%c0_33, %c0_34] : memref<128x128xf32, #tpu.memory_space<vmem>>, vector<128x128xf32>
        %cst_35 = arith.constant dense<0.000000e+00> : vector<8x128xf32>
        %55 = tpu.matmul %53, %54, %cst_35 {dimension_numbers = #tpu.dot_dimension_numbers<[1], [0], [0], [1], [0, 0, 1, 1], [], []>} : vector<8x128xf32>, vector<128x128xf32>, vector<8x128xf32> -> vector<8x128xf32>
        %c0_36 = arith.constant 0 : index
        %c0_37 = arith.constant 0 : index
        %56 = vector.load %arg12[%c0_36, %c0_37] : memref<8x128xf32, #tpu.memory_space<vmem>>, vector<8x128xf32>
        tpu.vector_store %arg12[%c0_36, %c0_37], %55 {strides = array<i32>} : memref<8x128xf32, #tpu.memory_space<vmem>>, vector<8x128xf32>,
      } else {
      }
      %c0_12 = arith.constant 0 : index
      %c0_13 = arith.constant 0 : index
      %25 = vector.load %arg11[%c0_12, %c0_13] : memref<1x8xf32, #tpu.memory_space<vmem>>, vector<1x8xf32>
      %26 = vector.broadcast %25 : vector<1x8xf32> to vector<256x8xf32>
      %27 = arith.mulf %15, %26 : vector<256x8xf32>
      %c0_14 = arith.constant 0 : index
      %c0_15 = arith.constant 0 : index
      %28 = vector.load %arg5[%c0_14, %c0_15] : memref<128x128xbf16, #tpu.memory_space<vmem>>, vector<128x128xbf16>
      %cst_16 = arith.constant dense<0.000000e+00> : vector<256x128xf32>
      %29 = tpu.matmul %9, %28, %cst_16 {dimension_numbers = #tpu.dot_dimension_numbers<[1], [0], [0], [1], [0, 0, 1, 1], [], []>} : vector<256x128xbf16>, vector<128x128xbf16>, vector<256x128xf32> -> vector<256x128xf32>
      %c0_17 = arith.constant 0 : index
      %c0_18 = arith.constant 0 : index
      %30 = vector.load %arg6[%c0_17, %c0_18] : memref<1x128xf32, #tpu.memory_space<vmem>>, vector<1x128xf32>
      %31 = vector.broadcast %30 : vector<1x128xf32> to vector<256x128xf32>
      %32 = arith.addf %29, %31 : vector<256x128xf32>
      %c0_19 = arith.constant 0 : index
      %c0_20 = arith.constant 0 : index
      %33 = vector.load %arg12[%c0_19, %c0_20] : memref<8x128xf32, #tpu.memory_space<vmem>>, vector<8x128xf32>
      %cst_21 = arith.constant dense<0.000000e+00> : vector<256x128xf32>
      %34 = tpu.matmul %27, %33, %cst_21 {dimension_numbers = #tpu.dot_dimension_numbers<[1], [0], [0], [1], [0, 0, 1, 1], [], []>} : vector<256x8xf32>, vector<8x128xf32>, vector<256x128xf32> -> vector<256x128xf32>
      %35 = arith.addf %32, %34 : vector<256x128xf32>
      %36 = arith.negf %35 : vector<256x128xf32>
      %37 = math.exp %36 : vector<256x128xf32>
      %cst_22 = arith.constant 1.000000e+00 : f32
      %38 = vector.broadcast %cst_22 : f32 to vector<256x128xf32>
      %39 = arith.addf %38, %37 : vector<256x128xf32>
      %40 = arith.divf %38, %39 : vector<256x128xf32>
      %c0_23 = arith.constant 0 : index
      %c0_24 = arith.constant 0 : index
      %41 = vector.load %arg8[%c0_23, %c0_24] : memref<1x128xf32, #tpu.memory_space<vmem>>, vector<1x128xf32>
      %42 = vector.broadcast %41 : vector<1x128xf32> to vector<256x128xf32>
      %43 = arith.mulf %40, %42 : vector<256x128xf32>
      %cst_25 = arith.constant dense<0.000000e+00> : vector<256xf32>
      %44 = vector.multi_reduction <add>, %43, %cst_25 [1] : vector<256x128xf32> to vector<256xf32>
      %45 = vector.shape_cast %44 : vector<256xf32> to vector<256x1xf32>
      %c0_26 = arith.constant 0 : index
      %c0_27 = arith.constant 0 : index
      %46 = vector.load %arg9[%c0_26, %c0_27] : memref<8x128xf32, #tpu.memory_space<vmem>>, vector<8x128xf32>
      %47 = vector.broadcast %45 : vector<256x1xf32> to vector<256x8xf32>
      %48 = arith.mulf %27, %47 : vector<256x8xf32>
      %49 = arith.truncf %48 : vector<256x8xf32> to vector<256x8xbf16>
      %cst_28 = arith.constant dense<0.000000e+00> : vector<8x128xf32>
      %50 = tpu.matmul %49, %9, %cst_28 {dimension_numbers = #tpu.dot_dimension_numbers<[0], [0], [1], [1], [0, 1, 1, 1], [], []>} : vector<256x8xbf16>, vector<256x128xbf16>, vector<8x128xf32> -> vector<8x128xf32>
      %51 = arith.addf %46, %50 : vector<8x128xf32>
      %c0_29 = arith.constant 0 : index
      %c0_30 = arith.constant 0 : index
      %52 = vector.load %arg9[%c0_29, %c0_30] : memref<8x128xf32, #tpu.memory_space<vmem>>, vector<8x128xf32>
      tpu.vector_store %arg9[%c0_29, %c0_30], %51 {strides = array<i32>} : memref<8x128xf32, #tpu.memory_space<vmem>>, vector<8x128xf32>,
    } else {
    }
    return
  }
  func.func @transform_0(%arg0: i32, %arg1: i32) -> (i32, i32) {
    %c0_i32 = arith.constant 0 : i32
    %c0_i32_0 = arith.constant 0 : i32
    return %arg1, %c0_i32 : i32, i32
  }
  func.func @transform_1(%arg0: i32, %arg1: i32) -> (i32, i32) {
    %c0_i32 = arith.constant 0 : i32
    %c0_i32_0 = arith.constant 0 : i32
    return %arg1, %c0_i32 : i32, i32
  }
  func.func @transform_2(%arg0: i32, %arg1: i32) -> (i32, i32) {
    %c0_i32 = arith.constant 0 : i32
    %c0_i32_0 = arith.constant 0 : i32
    %c0_i32_1 = arith.constant 0 : i32
    return %c0_i32, %c0_i32_0 : i32, i32
  }
  func.func @transform_3(%arg0: i32, %arg1: i32) -> (i32, i32) {
    %c0_i32 = arith.constant 0 : i32
    %c0_i32_0 = arith.constant 0 : i32
    %c0_i32_1 = arith.constant 0 : i32
    return %c0_i32, %c0_i32_0 : i32, i32
  }
  func.func @transform_4(%arg0: i32, %arg1: i32) -> (i32, i32) {
    %c0_i32 = arith.constant 0 : i32
    %c0_i32_0 = arith.constant 0 : i32
    %c0_i32_1 = arith.constant 0 : i32
    return %c0_i32, %c0_i32_0 : i32, i32
  }
  func.func @transform_5(%arg0: i32, %arg1: i32) -> (i32, i32) {
    %c0_i32 = arith.constant 0 : i32
    %c0_i32_0 = arith.constant 0 : i32
    %c0_i32_1 = arith.constant 0 : i32
    return %c0_i32, %c0_i32_0 : i32, i32
  }
  func.func @transform_6(%arg0: i32, %arg1: i32) -> (i32, i32) {
    %c0_i32 = arith.constant 0 : i32
    %c0_i32_0 = arith.constant 0 : i32
    %c0_i32_1 = arith.constant 0 : i32
    return %c0_i32, %c0_i32_0 : i32, i32
  }
  func.func @transform_7(%arg0: i32, %arg1: i32) -> (i32, i32) {
    %c0_i32 = arith.constant 0 : i32
    %c0_i32_0 = arith.constant 0 : i32
    %c0_i32_1 = arith.constant 0 : i32
    return %c0_i32, %c0_i32_0 : i32, i32
  }
}

</mosaic_0001>

<llo_original>
// kernel: tpu_custom_call.1
$region0: #{tpu_custom_call.1}
  #allocation0 [shape = 'u32[]', space=smem, size = 0x4, offset = 0x4, fixed_abs, tag = 'smem constant byte address 0x4 - core index']
  #allocation1 [shape = 'u32[144,128]{1,0:T(1,128)}', space=vmem, size = 0x12000, scoped, tag = 'internal scratch']
  #allocation2 [shape = 'f32[8,128]{1,0:T(8,128)}', space=vmem, size = 0x1000, scoped, tag = 'scratch operand']
  #allocation3 [shape = 'f32[1,8]{1,0:T(1,128)}', space=vmem, size = 0x200, scoped, tag = 'scratch operand']
  #allocation4 [shape = 'f32[8,128]{1,0:T(8,128)}', space=vmem, size = 0x1000, scoped, tag = 'scratch operand']
  %s0 = inlined_call_operand.vmem [shape: bf16[512,42], index: 0, kind: input, shape index: {}]
  %s1 = inlined_call_operand.vmem [shape: s32[512,1], index: 1, kind: input, shape index: {}]
  %s2 = inlined_call_operand.vmem [shape: bf16[42,128], index: 2, kind: input, shape index: {}]
  %s3 = inlined_call_operand.vmem [shape: bf16[128,128], index: 3, kind: input, shape index: {}]
  %s4 = inlined_call_operand.vmem [shape: f32[1,128], index: 4, kind: input, shape index: {}]
  %s5 = inlined_call_operand.vmem [shape: f32[128,128], index: 5, kind: input, shape index: {}]
  %s6 = inlined_call_operand.vmem [shape: f32[1,128], index: 6, kind: input, shape index: {}]
  %s7 = inlined_call_operand.hbm [shape: f32[8,128], index: 7, kind: output, shape index: {}]
  %s8 = sld [smem:[#allocation0]]
  $region81: #{tpu_custom_call.1} parent=0
    _
  %s10 = ssub.s32 1, %s8
  %s11 = scalar_select 0, %s10, %s8
  $region1: #{tpu_custom_call.1} parent=0
    #allocation5 [shape = 'u8[4096]{0}', space=vmem, size = 0x1000, scoped, tag = 'output window, operand 0, single buffered']
    #allocation6 [shape = 's32[2]{0}', space=sflag, size = 0x8, scoped, tag = 'scoped memory for tpu_custom_call.1']
    %12 = vsyncpa [#allocation6], 0
    loop: start=0, step=1, limit=6
    $region2: #{tpu_custom_call.1} parent=1 // loop_pre_header
      _
    $region3: #{tpu_custom_call.1} parent=1 // loop_header
      %s14 = sphi 0, %s18
      %p15 = scmp.ge.s32.totalorder %s14, 6
      %s21 = sphi 0, %s33
      %s22 = sphi 0, %s29
      %s23 = sphi 0, %s21
      %s24 = sphi 0, %s22
      %s25 = sphi 0, %s23
      %s26 = sphi 0, %s24
      %s36 = sphi 0, %s38
      %s39 = sphi 0, %s36
      %s40 = sphi 0, %s39
      %s56 = sphi 0, %s40
      %s62 = sphi 0, %s64
      %s65 = sphi 0, %s62
      %s66 = sphi 0, %s65
      %s82 = sphi 0, %s66
      %s86 = sphi 0, %s86
      %s88 = sphi 0, %s86
      %s89 = sphi 0, %s88
      %s103 = sphi 0, %s89
      %s107 = sphi 0, %s107
      %s109 = sphi 0, %s107
      %s110 = sphi 0, %s109
      %s124 = sphi 0, %s110
      %s128 = sphi 0, %s128
      %s130 = sphi 0, %s128
      %s131 = sphi 0, %s130
      %s145 = sphi 0, %s131
      %s149 = sphi 0, %s149
      %s151 = sphi 0, %s149
      %s152 = sphi 0, %s151
      %s166 = sphi 0, %s152
      %s170 = sphi 0, %s170
      %s172 = sphi 0, %s170
      %s173 = sphi 0, %s172
      %s187 = sphi 0, %s173
      %s191 = sphi 0, %s191
      %s193 = sphi 0, %s191
      %s194 = sphi 0, %s193
      %s208 = sphi 0, %s194
    $region4: #{tpu_custom_call.1} parent=1 // loop_header_branch
      %17 = sbr.rel (%p15) target = $region8
    $region5: #{tpu_custom_call.1} parent=1 // loop_body
      %s19 = ssub.s32 %s14, 1
      %s20 = ssub.s32 %s14, 2
      %s27 = sadd.s32 1, %s22
      %p28 = scmp.ge.s32.totalorder %s27, 2
      %s29 = scalar_select %p28, 0, %s27
      %s30 = sadd.s32 1, %s21
      %s31 = scalar_select %p28, %s30, %s21
      %p32 = scmp.ge.s32.totalorder %s31, 2
      %s33 = scalar_select %p32, 0, %s31
      %s34 = ssub.s32 %s22, %s29
      %p35 = scmp.eq.s32.totalorder %s34, 0
      %s37 = sadd.s32 %s36, 1
      %s38 = scalar_select %p35, %s36, %s37
      %p41 = pneg %p35
      %p42 = scmp.eq.s32.totalorder %s14, 3
      %p43 = por %p41, %p42
      %p44 = scmp.ne.s32.totalorder %s36, %s39
      %p45 = scmp.eq.s32.totalorder %s14, 0
      %p46 = por %p44, %p45
      %p47 = scmp.ne.s32.totalorder %s36, %s39
      %p48 = scmp.eq.s32.totalorder %s19, 3
      %p49 = por %p47, %p48
      %p50 = scmp.ne.s32.totalorder %s39, %s40
      %p51 = scmp.eq.s32.totalorder %s19, 0
      %p52 = por %p50, %p51
      %p53 = scmp.ne.s32.totalorder %s39, %s40
      %p54 = scmp.eq.s32.totalorder %s20, 3
      %p55 = por %p53, %p54
      %p57 = scmp.ne.s32.totalorder %s40, %s56
      %p58 = scmp.eq.s32.totalorder %s20, 0
      %p59 = por %p57, %p58
      %s60 = ssub.s32 %s22, %s29
      %p61 = scmp.eq.s32.totalorder %s60, 0
      %s63 = sadd.s32 %s62, 1
      %s64 = scalar_select %p61, %s62, %s63
      %p67 = pneg %p61
      %p68 = scmp.eq.s32.totalorder %s14, 3
      %p69 = por %p67, %p68
      %p70 = scmp.ne.s32.totalorder %s62, %s65
      %p71 = scmp.eq.s32.totalorder %s14, 0
      %p72 = por %p70, %p71
      %p73 = scmp.ne.s32.totalorder %s62, %s65
      %p74 = scmp.eq.s32.totalorder %s19, 3
      %p75 = por %p73, %p74
      %p76 = scmp.ne.s32.totalorder %s65, %s66
      %p77 = scmp.eq.s32.totalorder %s19, 0
      %p78 = por %p76, %p77
      %p79 = scmp.ne.s32.totalorder %s65, %s66
      %p80 = scmp.eq.s32.totalorder %s20, 3
      %p81 = por %p79, %p80
      %p83 = scmp.ne.s32.totalorder %s66, %s82
      %p84 = scmp.eq.s32.totalorder %s20, 0
      %p85 = por %p83, %p84
      %s87 = sadd.s32 %s86, 1
      %p90 = scmp.eq.s32.totalorder %s14, 3
      %p91 = scmp.ne.s32.totalorder %s86, %s88
      %p92 = scmp.eq.s32.totalorder %s14, 0
      %p93 = por %p91, %p92
      %p94 = scmp.ne.s32.totalorder %s86, %s88
      %p95 = scmp.eq.s32.totalorder %s19, 3
      %p96 = por %p94, %p95
      %p97 = scmp.ne.s32.totalorder %s88, %s89
      %p98 = scmp.eq.s32.totalorder %s19, 0
      %p99 = por %p97, %p98
      %p100 = scmp.ne.s32.totalorder %s88, %s89
      %p101 = scmp.eq.s32.totalorder %s20, 3
      %p102 = por %p100, %p101
      %p104 = scmp.ne.s32.totalorder %s89, %s103
      %p105 = scmp.eq.s32.totalorder %s20, 0
      %p106 = por %p104, %p105
      %s108 = sadd.s32 %s107, 1
      %p111 = scmp.eq.s32.totalorder %s14, 3
      %p112 = scmp.ne.s32.totalorder %s107, %s109
      %p113 = scmp.eq.s32.totalorder %s14, 0
      %p114 = por %p112, %p113
      %p115 = scmp.ne.s32.totalorder %s107, %s109
      %p116 = scmp.eq.s32.totalorder %s19, 3
      %p117 = por %p115, %p116
      %p118 = scmp.ne.s32.totalorder %s109, %s110
      %p119 = scmp.eq.s32.totalorder %s19, 0
      %p120 = por %p118, %p119
      %p121 = scmp.ne.s32.totalorder %s109, %s110
      %p122 = scmp.eq.s32.totalorder %s20, 3
      %p123 = por %p121, %p122
      %p125 = scmp.ne.s32.totalorder %s110, %s124
      %p126 = scmp.eq.s32.totalorder %s20, 0
      %p127 = por %p125, %p126
      %s129 = sadd.s32 %s128, 1
      %p132 = scmp.eq.s32.totalorder %s14, 3
      %p133 = scmp.ne.s32.totalorder %s128, %s130
      %p134 = scmp.eq.s32.totalorder %s14, 0
      %p135 = por %p133, %p134
      %p136 = scmp.ne.s32.totalorder %s128, %s130
      %p137 = scmp.eq.s32.totalorder %s19, 3
      %p138 = por %p136, %p137
      %p139 = scmp.ne.s32.totalorder %s130, %s131
      %p140 = scmp.eq.s32.totalorder %s19, 0
      %p141 = por %p139, %p140
      %p142 = scmp.ne.s32.totalorder %s130, %s131
      %p143 = scmp.eq.s32.totalorder %s20, 3
      %p144 = por %p142, %p143
      %p146 = scmp.ne.s32.totalorder %s131, %s145
      %p147 = scmp.eq.s32.totalorder %s20, 0
      %p148 = por %p146, %p147
      %s150 = sadd.s32 %s149, 1
      %p153 = scmp.eq.s32.totalorder %s14, 3
      %p154 = scmp.ne.s32.totalorder %s149, %s151
      %p155 = scmp.eq.s32.totalorder %s14, 0
      %p156 = por %p154, %p155
      %p157 = scmp.ne.s32.totalorder %s149, %s151
      %p158 = scmp.eq.s32.totalorder %s19, 3
      %p159 = por %p157, %p158
      %p160 = scmp.ne.s32.totalorder %s151, %s152
      %p161 = scmp.eq.s32.totalorder %s19, 0
      %p162 = por %p160, %p161
      %p163 = scmp.ne.s32.totalorder %s151, %s152
      %p164 = scmp.eq.s32.totalorder %s20, 3
      %p165 = por %p163, %p164
      %p167 = scmp.ne.s32.totalorder %s152, %s166
      %p168 = scmp.eq.s32.totalorder %s20, 0
      %p169 = por %p167, %p168
      %s171 = sadd.s32 %s170, 1
      %p174 = scmp.eq.s32.totalorder %s14, 3
      %p175 = scmp.ne.s32.totalorder %s170, %s172
      %p176 = scmp.eq.s32.totalorder %s14, 0
      %p177 = por %p175, %p176
      %p178 = scmp.ne.s32.totalorder %s170, %s172
      %p179 = scmp.eq.s32.totalorder %s19, 3
      %p180 = por %p178, %p179
      %p181 = scmp.ne.s32.totalorder %s172, %s173
      %p182 = scmp.eq.s32.totalorder %s19, 0
      %p183 = por %p181, %p182
      %p184 = scmp.ne.s32.totalorder %s172, %s173
      %p185 = scmp.eq.s32.totalorder %s20, 3
      %p186 = por %p184, %p185
      %p188 = scmp.ne.s32.totalorder %s173, %s187
      %p189 = scmp.eq.s32.totalorder %s20, 0
      %p190 = por %p188, %p189
      %s192 = sadd.s32 %s191, 1
      %p195 = scmp.eq.s32.totalorder %s14, 3
      %p196 = scmp.ne.s32.totalorder %s191, %s193
      %p197 = scmp.eq.s32.totalorder %s14, 0
      %p198 = por %p196, %p197
      %p199 = scmp.ne.s32.totalorder %s191, %s193
      %p200 = scmp.eq.s32.totalorder %s19, 3
      %p201 = por %p199, %p200
      %p202 = scmp.ne.s32.totalorder %s193, %s194
      %p203 = scmp.eq.s32.totalorder %s19, 0
      %p204 = por %p202, %p203
      %p205 = scmp.ne.s32.totalorder %s193, %s194
      %p206 = scmp.eq.s32.totalorder %s20, 3
      %p207 = por %p205, %p206
      %p209 = scmp.ne.s32.totalorder %s194, %s208
      %p210 = scmp.eq.s32.totalorder %s20, 0
      %p211 = por %p209, %p210
      %p212 = scmp.le.s32.totalorder 1, %s14
      %p213 = scmp.lt.s32.totalorder %s14, 5
      %p214 = pnand %p212, %p213
      %p215 = pneg %p214
      // Predicated region
      $region9: #{tpu_custom_call.1} parent=5 // pred_check
        _
      $region10: #{tpu_custom_call.1} parent=5 // pred_check_branch
        %217 = sbr.rel (%p214) target = $region12
      $region11: #{tpu_custom_call.1} parent=5 // pred_region
        %s218 = ssub.s32 %s14, 1
        // Predicated region
        $region13: #{tpu_custom_call.1} parent=11 // pred_check
          %p219 = pneg %p99
        $region14: #{tpu_custom_call.1} parent=11 // pred_check_branch
          %221 = sbr.rel (%p219) target = $region16
        $region15: #{tpu_custom_call.1} parent=11 // pred_region
          _
        $region16: #{tpu_custom_call.1} parent=11 // pred_fallthru
          _
        // Predicated region
        $region17: #{tpu_custom_call.1} parent=11 // pred_check
          %p222 = pneg %p120
        $region18: #{tpu_custom_call.1} parent=11 // pred_check_branch
          %224 = sbr.rel (%p222) target = $region20
        $region19: #{tpu_custom_call.1} parent=11 // pred_region
          _
        $region20: #{tpu_custom_call.1} parent=11 // pred_fallthru
          _
        // Predicated region
        $region21: #{tpu_custom_call.1} parent=11 // pred_check
          %p225 = pneg %p141
        $region22: #{tpu_custom_call.1} parent=11 // pred_check_branch
          %227 = sbr.rel (%p225) target = $region24
        $region23: #{tpu_custom_call.1} parent=11 // pred_region
          _
        $region24: #{tpu_custom_call.1} parent=11 // pred_fallthru
          _
        // Predicated region
        $region25: #{tpu_custom_call.1} parent=11 // pred_check
          %p228 = pneg %p162
        $region26: #{tpu_custom_call.1} parent=11 // pred_check_branch
          %230 = sbr.rel (%p228) target = $region28
        $region27: #{tpu_custom_call.1} parent=11 // pred_region
          _
        $region28: #{tpu_custom_call.1} parent=11 // pred_fallthru
          _
        // Predicated region
        $region29: #{tpu_custom_call.1} parent=11 // pred_check
          %p231 = pneg %p183
        $region30: #{tpu_custom_call.1} parent=11 // pred_check_branch
          %233 = sbr.rel (%p231) target = $region32
        $region31: #{tpu_custom_call.1} parent=11 // pred_region
          _
        $region32: #{tpu_custom_call.1} parent=11 // pred_fallthru
          _
      $region12: #{tpu_custom_call.1} parent=5 // pred_fallthru
        _
      %p234 = scmp.lt.s32.totalorder %s14, 4
      // Predicated region
      $region33: #{tpu_custom_call.1} parent=5 // pred_check
        %p235 = pneg %p234
      $region34: #{tpu_custom_call.1} parent=5 // pred_check_branch
        %237 = sbr.rel (%p235) target = $region36
      $region35: #{tpu_custom_call.1} parent=5 // pred_region
        // Predicated region
        $region37: #{tpu_custom_call.1} parent=35 // pred_check
          %p238 = pneg %p46
        $region38: #{tpu_custom_call.1} parent=35 // pred_check_branch
          %240 = sbr.rel (%p238) target = $region40
        $region39: #{tpu_custom_call.1} parent=35 // pred_region
          %s241 = smul.u32 32, %s22
          %p242 = scmp.lt.s32.totalorder %s241, 63
          %s243 = scalar_select %p242, %s241, 63
          %s244 = smul.addr %s243, 4
          %s245 = scalar_lea.vmem %s0, %s244
          %s246 = smul.u32 32, %s22
        $region40: #{tpu_custom_call.1} parent=35 // pred_fallthru
          _
        // Predicated region
        $region41: #{tpu_custom_call.1} parent=35 // pred_check
          %p247 = pneg %p72
        $region42: #{tpu_custom_call.1} parent=35 // pred_check_branch
          %249 = sbr.rel (%p247) target = $region44
        $region43: #{tpu_custom_call.1} parent=35 // pred_region
          %s250 = smul.u32 32, %s22
          %p251 = scmp.lt.s32.totalorder %s250, 63
          %s252 = scalar_select %p251, %s250, 63
          %s253 = smul.addr %s252, 8
          %s254 = scalar_lea.vmem %s1, %s253
          %s255 = smul.u32 32, %s22
        $region44: #{tpu_custom_call.1} parent=35 // pred_fallthru
          _
      $region36: #{tpu_custom_call.1} parent=5 // pred_fallthru
        _
      %p256 = scmp.le.s32.totalorder 1, %s14
      %p257 = scmp.lt.s32.totalorder %s14, 5
      %p258 = pnand %p256, %p257
      %p259 = pneg %p258
      // Predicated region
      $region45: #{tpu_custom_call.1} parent=5 // pred_check
        _
      $region46: #{tpu_custom_call.1} parent=5 // pred_check_branch
        %261 = sbr.rel (%p258) target = $region48
      $region47: #{tpu_custom_call.1} parent=5 // pred_region
        %s262 = ssub.s32 %s14, 1
        %s263 = smul.u32 32, %s24
        %p264 = scmp.lt.s32.totalorder %s263, 63
        %s265 = scalar_select %p264, %s263, 63
        %s266 = smul.addr %s265, 4
        %s267 = scalar_lea.vmem %s0, %s266
        %p268 = pneg %p52
        %p269 = pneg %p49
        %s270 = smul.u32 32, %s24
        %p271 = scmp.lt.s32.totalorder %s270, 63
        %s272 = scalar_select %p271, %s270, 63
        %s273 = smul.addr %s272, 8
        %s274 = scalar_lea.vmem %s1, %s273
        %p275 = pneg %p78
        %p276 = pneg %p75
        %p277 = pneg %p99
        %p278 = pneg %p96
        %p279 = pneg %p120
        %p280 = pneg %p117
        %p281 = pneg %p141
        %p282 = pneg %p138
        %p283 = pneg %p162
        %p284 = pneg %p159
        %p285 = pneg %p183
        %p286 = pneg %p180
        %p287 = pneg %p204
        %p288 = pneg %p201
        %s289 = smul.u32 32, %s24
        %p290 = scmp.lt.s32.totalorder %s289, 63
        %s291 = scalar_select %p290, %s289, 63
        %s292 = smul.addr %s291, 4
        %s293 = scalar_lea.vmem %s0, %s292
        %s294 = smul.u32 32, %s24
        %s295 = smul.u32 32, %s24
        %p296 = scmp.lt.s32.totalorder %s295, 63
        %s297 = scalar_select %p296, %s295, 63
        %s298 = smul.addr %s297, 8
        %s299 = scalar_lea.vmem %s1, %s298
        %s300 = smul.u32 32, %s24
        %p302 = scmp.eq.s32.totalorder %s23, 0
        %p303 = scmp.eq.s32.totalorder %s24, 0
        %p304 = pnand %p302, %p303
        %p305 = pneg %p304
        // Predicated region
        $region49: #{tpu_custom_call.1} parent=47 // pred_check
          _
        $region50: #{tpu_custom_call.1} parent=47 // pred_check_branch
          %307 = sbr.rel (%p304) target = $region52
        $region51: #{tpu_custom_call.1} parent=47 // pred_region
          %308 = vst [vmem:[#allocation2] sm:$0xff] 0.0
          %vm309 = vcmask 57344
          %310 = vst.msk [vmem:[#allocation3] sm:$0x1] %vm309, 0.0
          %311 = vst [vmem:[#allocation5] sm:$0xff] 0.0
        $region52: #{tpu_custom_call.1} parent=47 // pred_fallthru
          _
        %v312 = vld [vmem:[%s293] sm:$0xf]
        %v313 = vld [vmem:[%s293 + $0x4] sm:$0xf]
        %v314 = vld [vmem:[%s293 + $0x8] sm:$0xf]
        %v315 = vld [vmem:[%s293 + $0xc] sm:$0xf]
        %v316 = vld [vmem:[%s293 + $0x10] sm:$0xf]
        %v317 = vld [vmem:[%s293 + $0x14] sm:$0xf]
        %v318 = vld [vmem:[%s293 + $0x18] sm:$0xf]
        %v319 = vld [vmem:[%s293 + $0x1c] sm:$0xf]
        %v320 = vld [vmem:[%s293 + $0x20] sm:$0xf]
        %v321 = vld [vmem:[%s293 + $0x24] sm:$0xf]
        %v322 = vld [vmem:[%s293 + $0x28] sm:$0xf]
        %v323 = vld [vmem:[%s293 + $0x2c] sm:$0xf]
        %v324 = vld [vmem:[%s293 + $0x30] sm:$0xf]
        %v325 = vld [vmem:[%s293 + $0x34] sm:$0xf]
        %v326 = vld [vmem:[%s293 + $0x38] sm:$0xf]
        %v327 = vld [vmem:[%s293 + $0x3c] sm:$0xf]
        %v328 = vld [vmem:[%s293 + $0x40] sm:$0xf]
        %v329 = vld [vmem:[%s293 + $0x44] sm:$0xf]
        %v330 = vld [vmem:[%s293 + $0x48] sm:$0xf]
        %v331 = vld [vmem:[%s293 + $0x4c] sm:$0xf]
        %v332 = vld [vmem:[%s293 + $0x50] sm:$0xf]
        %v333 = vld [vmem:[%s293 + $0x54] sm:$0xf]
        %v334 = vld [vmem:[%s293 + $0x58] sm:$0xf]
        %v335 = vld [vmem:[%s293 + $0x5c] sm:$0xf]
        %v336 = vld [vmem:[%s293 + $0x60] sm:$0xf]
        %v337 = vld [vmem:[%s293 + $0x64] sm:$0xf]
        %v338 = vld [vmem:[%s293 + $0x68] sm:$0xf]
        %v339 = vld [vmem:[%s293 + $0x6c] sm:$0xf]
        %v340 = vld [vmem:[%s293 + $0x70] sm:$0xf]
        %v341 = vld [vmem:[%s293 + $0x74] sm:$0xf]
        %v342 = vld [vmem:[%s293 + $0x78] sm:$0xf]
        %v343 = vld [vmem:[%s293 + $0x7c] sm:$0xf]
        %v344 = vld [vmem:[%s2] sm:$0xf]
        %v345 = vld [vmem:[%s2 + $0x4] sm:$0xf]
        %v346 = vld [vmem:[%s2 + $0x8] sm:$0xf]
        %v347 = vld [vmem:[%s2 + $0xc] sm:$0xf]
        %v348 = vld [vmem:[%s2 + $0x10] sm:$0xf]
        %v349 = vld [vmem:[%s2 + $0x14] sm:$0x1]
        %v382 = vunpack.c.l.b16 %v312
        %v383 = vunpack.c.l.b16 %v313
        %v384 = vunpack.c.l.b16 %v314
        %v385 = vunpack.c.l.b16 %v315
        %v386 = vunpack.c.l.b16 %v316
        %v387 = vunpack.c.l.b16 %v317
        %v388 = vunpack.c.l.b16 %v318
        %v389 = vunpack.c.l.b16 %v319
        %v390 = vunpack.c.l.b16 %v320
        %v391 = vunpack.c.l.b16 %v321
        %v392 = vunpack.c.l.b16 %v322
        %v393 = vunpack.c.l.b16 %v323
        %v394 = vunpack.c.l.b16 %v324
        %v395 = vunpack.c.l.b16 %v325
        %v396 = vunpack.c.l.b16 %v326
        %v397 = vunpack.c.l.b16 %v327
        %v398 = vunpack.c.l.b16 %v328
        %v399 = vunpack.c.l.b16 %v329
        %v400 = vunpack.c.l.b16 %v330
        %v401 = vunpack.c.l.b16 %v331
        %v402 = vunpack.c.l.b16 %v332
        %v403 = vunpack.c.l.b16 %v333
        %v404 = vunpack.c.l.b16 %v334
        %v405 = vunpack.c.l.b16 %v335
        %v406 = vunpack.c.l.b16 %v336
        %v407 = vunpack.c.l.b16 %v337
        %v408 = vunpack.c.l.b16 %v338
        %v409 = vunpack.c.l.b16 %v339
        %v410 = vunpack.c.l.b16 %v340
        %v411 = vunpack.c.l.b16 %v341
        %v412 = vunpack.c.l.b16 %v342
        %v413 = vunpack.c.l.b16 %v343
        %v414 = vpack.c.b16 %v383, %v382
        %v415 = vpack.c.b16 %v385, %v384
        %v416 = vpack.c.b16 %v387, %v386
        %v417 = vpack.c.b16 %v389, %v388
        %v418 = vpack.c.b16 %v391, %v390
        %v419 = vpack.c.b16 %v393, %v392
        %v420 = vpack.c.b16 %v395, %v394
        %v421 = vpack.c.b16 %v397, %v396
        %v422 = vpack.c.b16 %v399, %v398
        %v423 = vpack.c.b16 %v401, %v400
        %v424 = vpack.c.b16 %v403, %v402
        %v425 = vpack.c.b16 %v405, %v404
        %v426 = vpack.c.b16 %v407, %v406
        %v427 = vpack.c.b16 %v409, %v408
        %v428 = vpack.c.b16 %v411, %v410
        %v429 = vpack.c.b16 %v413, %v412
        %v436 = vunpack.c.l.b16 %v344
        %v437 = vunpack.c.l.b16 %v345
        %v438 = vunpack.c.l.b16 %v346
        %v439 = vunpack.c.l.b16 %v347
        %v440 = vunpack.c.l.b16 %v348
        %v441 = vunpack.c.l.b16 %v349
        %v442 = vpack.c.b16 %v437, %v436
        %v443 = vpack.c.b16 %v439, %v438
        %v444 = vpack.c.b16 %v441, %v440
        %vm447 = vcmask 343040
        %v449 = vsel %vm447, %v414, 0
        %v452 = vsel %vm447, %v415, 0
        %v455 = vsel %vm447, %v416, 0
        %v458 = vsel %vm447, %v417, 0
        %v461 = vsel %vm447, %v418, 0
        %v464 = vsel %vm447, %v419, 0
        %v467 = vsel %vm447, %v420, 0
        %v470 = vsel %vm447, %v421, 0
        %v473 = vsel %vm447, %v422, 0
        %v476 = vsel %vm447, %v423, 0
        %v479 = vsel %vm447, %v424, 0
        %v482 = vsel %vm447, %v425, 0
        %v485 = vsel %vm447, %v426, 0
        %v488 = vsel %vm447, %v427, 0
        %v491 = vsel %vm447, %v428, 0
        %v494 = vsel %vm447, %v429, 0
        %vm496 = vcmask 1044480
        %v498 = vsel %vm496, %v444, 0
        %500 = vmatprep.subr.bf16.mxu0 0
        %501 = vmatpush1.bf16.msra.mxu0 %v442
        %502 = vmatprep.subr.bf16.mxu0 0
        %503 = vmatpush1.bf16.msra.mxu0 %v443
        %504 = vmatprep.subr.bf16.mxu0 0
        %505 = vmatpush1.bf16.msra.mxu0 %v498
        %506 = vmatprep.subr.bf16.mxu0 0
        %507 = vmatpush1.bf16.msra.mxu0 0
        %508 = vmatprep.subr.bf16.mxu0 0
        %509 = vmatpush1.bf16.msra.mxu0 0
        %510 = vmatprep.subr.bf16.mxu0 0
        %511 = vmatpush1.bf16.msra.mxu0 0
        %512 = vmatprep.subr.bf16.mxu0 0
        %513 = vmatpush1.bf16.msra.mxu0 0
        %514 = vmatprep.subr.bf16.mxu0 0
        %515 = vmatpush1.bf16.msra.mxu0 0
        %516 = vmatprep.subr.bf16.mxu0 0
        %517 = vmatpush1.bf16.msra.mxu0 0
        %518 = vmatprep.subr.bf16.mxu0 0
        %519 = vmatpush1.bf16.msra.mxu0 0
        %520 = vmatprep.subr.bf16.mxu0 0
        %521 = vmatpush1.bf16.msra.mxu0 0
        %522 = vmatprep.subr.bf16.mxu0 0
        %523 = vmatpush1.bf16.msra.mxu0 0
        %524 = vmatprep.subr.bf16.mxu0 0
        %525 = vmatpush1.bf16.msra.mxu0 0
        %526 = vmatprep.subr.bf16.mxu0 0
        %527 = vmatpush1.bf16.msra.mxu0 0
        %528 = vmatprep.subr.bf16.mxu0 0
        %529 = vmatpush1.bf16.msra.mxu0 0
        %530 = vmatprep.subr.bf16.mxu0 0
        %531 = vmatpush1.bf16.msra.mxu0 0
        %532 = vmatprep.mubr.bf16.mxu0 0
        %533 = vmatmul.mubr.bf16.gmra.mrb[0].mxu0 %v449
        %v534 = vpop.f32.mrb[0].mxu0
        %v535 = vadd.f32 0.0, %v534
        %v536 = vpop.f32.mrb[0].mxu0
        %v537 = vpop.f32.mrb[0].mxu0
        %v538 = vadd.f32 0.0, %v537
        %v539 = vpop.f32.mrb[0].mxu0
        %540 = vmatprep.mubr.bf16.mxu0 0
        %541 = vmatmul.mubr.bf16.gmra.mrb[0].mxu0 %v452
        %v542 = vpop.f32.mrb[0].mxu0
        %v543 = vadd.f32 0.0, %v542
        %v544 = vpop.f32.mrb[0].mxu0
        %v545 = vpop.f32.mrb[0].mxu0
        %v546 = vadd.f32 0.0, %v545
        %v547 = vpop.f32.mrb[0].mxu0
        %548 = vmatprep.mubr.bf16.mxu0 0
        %549 = vmatmul.mubr.bf16.gmra.mrb[0].mxu0 %v455
        %v550 = vpop.f32.mrb[0].mxu0
        %v551 = vadd.f32 0.0, %v550
        %v552 = vpop.f32.mrb[0].mxu0
        %v553 = vpop.f32.mrb[0].mxu0
        %v554 = vadd.f32 0.0, %v553
        %v555 = vpop.f32.mrb[0].mxu0
        %556 = vmatprep.mubr.bf16.mxu0 0
        %557 = vmatmul.mubr.bf16.gmra.mrb[0].mxu0 %v458
        %v558 = vpop.f32.mrb[0].mxu0
        %v559 = vadd.f32 0.0, %v558
        %v560 = vpop.f32.mrb[0].mxu0
        %v561 = vpop.f32.mrb[0].mxu0
        %v562 = vadd.f32 0.0, %v561
        %v563 = vpop.f32.mrb[0].mxu0
        %564 = vmatprep.mubr.bf16.mxu0 0
        %565 = vmatmul.mubr.bf16.gmra.mrb[0].mxu0 %v461
        %v566 = vpop.f32.mrb[0].mxu0
        %v567 = vadd.f32 0.0, %v566
        %v568 = vpop.f32.mrb[0].mxu0
        %v569 = vpop.f32.mrb[0].mxu0
        %v570 = vadd.f32 0.0, %v569
        %v571 = vpop.f32.mrb[0].mxu0
        %572 = vmatprep.mubr.bf16.mxu0 0
        %573 = vmatmul.mubr.bf16.gmra.mrb[0].mxu0 %v464
        %v574 = vpop.f32.mrb[0].mxu0
        %v575 = vadd.f32 0.0, %v574
        %v576 = vpop.f32.mrb[0].mxu0
        %v577 = vpop.f32.mrb[0].mxu0
        %v578 = vadd.f32 0.0, %v577
        %v579 = vpop.f32.mrb[0].mxu0
        %580 = vmatprep.mubr.bf16.mxu0 0
        %581 = vmatmul.mubr.bf16.gmra.mrb[0].mxu0 %v467
        %v582 = vpop.f32.mrb[0].mxu0
        %v583 = vadd.f32 0.0, %v582
        %v584 = vpop.f32.mrb[0].mxu0
        %v585 = vpop.f32.mrb[0].mxu0
        %v586 = vadd.f32 0.0, %v585
        %v587 = vpop.f32.mrb[0].mxu0
        %588 = vmatprep.mubr.bf16.mxu0 0
        %589 = vmatmul.mubr.bf16.gmra.mrb[0].mxu0 %v470
        %v590 = vpop.f32.mrb[0].mxu0
        %v591 = vadd.f32 0.0, %v590
        %v592 = vpop.f32.mrb[0].mxu0
        %v593 = vpop.f32.mrb[0].mxu0
        %v594 = vadd.f32 0.0, %v593
        %v595 = vpop.f32.mrb[0].mxu0
        %596 = vmatprep.mubr.bf16.mxu0 0
        %597 = vmatmul.mubr.bf16.gmra.mrb[0].mxu0 %v473
        %v598 = vpop.f32.mrb[0].mxu0
        %v599 = vadd.f32 0.0, %v598
        %v600 = vpop.f32.mrb[0].mxu0
        %v601 = vpop.f32.mrb[0].mxu0
        %v602 = vadd.f32 0.0, %v601
        %v603 = vpop.f32.mrb[0].mxu0
        %604 = vmatprep.mubr.bf16.mxu0 0
        %605 = vmatmul.mubr.bf16.gmra.mrb[0].mxu0 %v476
        %v606 = vpop.f32.mrb[0].mxu0
        %v607 = vadd.f32 0.0, %v606
        %v608 = vpop.f32.mrb[0].mxu0
        %v609 = vpop.f32.mrb[0].mxu0
        %v610 = vadd.f32 0.0, %v609
        %v611 = vpop.f32.mrb[0].mxu0
        %612 = vmatprep.mubr.bf16.mxu0 0
        %613 = vmatmul.mubr.bf16.gmra.mrb[0].mxu0 %v479
        %v614 = vpop.f32.mrb[0].mxu0
        %v615 = vadd.f32 0.0, %v614
        %v616 = vpop.f32.mrb[0].mxu0
        %v617 = vpop.f32.mrb[0].mxu0
        %v618 = vadd.f32 0.0, %v617
        %v619 = vpop.f32.mrb[0].mxu0
        %620 = vmatprep.mubr.bf16.mxu0 0
        %621 = vmatmul.mubr.bf16.gmra.mrb[0].mxu0 %v482
        %v622 = vpop.f32.mrb[0].mxu0
        %v623 = vadd.f32 0.0, %v622
        %v624 = vpop.f32.mrb[0].mxu0
        %v625 = vpop.f32.mrb[0].mxu0
        %v626 = vadd.f32 0.0, %v625
        %v627 = vpop.f32.mrb[0].mxu0
        %628 = vmatprep.mubr.bf16.mxu0 0
        %629 = vmatmul.mubr.bf16.gmra.mrb[0].mxu0 %v485
        %v630 = vpop.f32.mrb[0].mxu0
        %v631 = vadd.f32 0.0, %v630
        %v632 = vpop.f32.mrb[0].mxu0
        %v633 = vpop.f32.mrb[0].mxu0
        %v634 = vadd.f32 0.0, %v633
        %v635 = vpop.f32.mrb[0].mxu0
        %636 = vmatprep.mubr.bf16.mxu0 0
        %637 = vmatmul.mubr.bf16.gmra.mrb[0].mxu0 %v488
        %v638 = vpop.f32.mrb[0].mxu0
        %v639 = vadd.f32 0.0, %v638
        %v640 = vpop.f32.mrb[0].mxu0
        %v641 = vpop.f32.mrb[0].mxu0
        %v642 = vadd.f32 0.0, %v641
        %v643 = vpop.f32.mrb[0].mxu0
        %644 = vmatprep.mubr.bf16.mxu0 0
        %645 = vmatmul.mubr.bf16.gmra.mrb[0].mxu0 %v491
        %v646 = vpop.f32.mrb[0].mxu0
        %v647 = vadd.f32 0.0, %v646
        %v648 = vpop.f32.mrb[0].mxu0
        %v649 = vpop.f32.mrb[0].mxu0
        %v650 = vadd.f32 0.0, %v649
        %v651 = vpop.f32.mrb[0].mxu0
        %652 = vmatprep.mubr.bf16.mxu0 0
        %653 = vmatmul.mubr.bf16.gmra.mrb[0].mxu0 %v494
        %v654 = vpop.f32.mrb[0].mxu0
        %v655 = vadd.f32 0.0, %v654
        %v656 = vpop.f32.mrb[0].mxu0
        %v657 = vpop.f32.mrb[0].mxu0
        %v658 = vadd.f32 0.0, %v657
        %v659 = vpop.f32.mrb[0].mxu0
        %660 = vdwg.mxu0
        %v661 = vtanh.pop %v535
        %v662 = vtanh.pop %v538
        %v663 = vtanh.pop %v543
        %v664 = vtanh.pop %v546
        %v665 = vtanh.pop %v551
        %v666 = vtanh.pop %v554
        %v667 = vtanh.pop %v559
        %v668 = vtanh.pop %v562
        %v669 = vtanh.pop %v567
        %v670 = vtanh.pop %v570
        %v671 = vtanh.pop %v575
        %v672 = vtanh.pop %v578
        %v673 = vtanh.pop %v583
        %v674 = vtanh.pop %v586
        %v675 = vtanh.pop %v591
        %v676 = vtanh.pop %v594
        %v677 = vtanh.pop %v599
        %v678 = vtanh.pop %v602
        %v679 = vtanh.pop %v607
        %v680 = vtanh.pop %v610
        %v681 = vtanh.pop %v615
        %v682 = vtanh.pop %v618
        %v683 = vtanh.pop %v623
        %v684 = vtanh.pop %v626
        %v685 = vtanh.pop %v631
        %v686 = vtanh.pop %v634
        %v687 = vtanh.pop %v639
        %v688 = vtanh.pop %v642
        %v689 = vtanh.pop %v647
        %v690 = vtanh.pop %v650
        %v691 = vtanh.pop %v655
        %v692 = vtanh.pop %v658
        %v693 = vpack.c.bf16 %v662, %v661
        %v694 = vpack.c.bf16 %v664, %v663
        %v695 = vpack.c.bf16 %v666, %v665
        %v696 = vpack.c.bf16 %v668, %v667
        %v697 = vpack.c.bf16 %v670, %v669
        %v698 = vpack.c.bf16 %v672, %v671
        %v699 = vpack.c.bf16 %v674, %v673
        %v700 = vpack.c.bf16 %v676, %v675
        %v701 = vpack.c.bf16 %v678, %v677
        %v702 = vpack.c.bf16 %v680, %v679
        %v703 = vpack.c.bf16 %v682, %v681
        %v704 = vpack.c.bf16 %v684, %v683
        %v705 = vpack.c.bf16 %v686, %v685
        %v706 = vpack.c.bf16 %v688, %v687
        %v707 = vpack.c.bf16 %v690, %v689
        %v708 = vpack.c.bf16 %v692, %v691
        %v709 = vlaneseq
        %v710 = vand.u32 %v709, 127
        %v711 = vld [vmem:[%s299] sm:$0xff]
        %v712 = vld [vmem:[%s299 + $0x8] sm:$0xff]
        %v713 = vld [vmem:[%s299 + $0x10] sm:$0xff]
        %v714 = vld [vmem:[%s299 + $0x18] sm:$0xff]
        %v715 = vld [vmem:[%s299 + $0x20] sm:$0xff]
        %v716 = vld [vmem:[%s299 + $0x28] sm:$0xff]
        %v717 = vld [vmem:[%s299 + $0x30] sm:$0xff]
        %v718 = vld [vmem:[%s299 + $0x38] sm:$0xff]
        %v719 = vld [vmem:[%s299 + $0x40] sm:$0xff]
        %v720 = vld [vmem:[%s299 + $0x48] sm:$0xff]
        %v721 = vld [vmem:[%s299 + $0x50] sm:$0xff]
        %v722 = vld [vmem:[%s299 + $0x58] sm:$0xff]
        %v723 = vld [vmem:[%s299 + $0x60] sm:$0xff]
        %v724 = vld [vmem:[%s299 + $0x68] sm:$0xff]
        %v725 = vld [vmem:[%s299 + $0x70] sm:$0xff]
        %v726 = vld [vmem:[%s299 + $0x78] sm:$0xff]
        %v727 = vld [vmem:[%s299 + $0x80] sm:$0xff]
        %v728 = vld [vmem:[%s299 + $0x88] sm:$0xff]
        %v729 = vld [vmem:[%s299 + $0x90] sm:$0xff]
        %v730 = vld [vmem:[%s299 + $0x98] sm:$0xff]
        %v731 = vld [vmem:[%s299 + $0xa0] sm:$0xff]
        %v732 = vld [vmem:[%s299 + $0xa8] sm:$0xff]
        %v733 = vld [vmem:[%s299 + $0xb0] sm:$0xff]
        %v734 = vld [vmem:[%s299 + $0xb8] sm:$0xff]
        %v735 = vld [vmem:[%s299 + $0xc0] sm:$0xff]
        %v736 = vld [vmem:[%s299 + $0xc8] sm:$0xff]
        %v737 = vld [vmem:[%s299 + $0xd0] sm:$0xff]
        %v738 = vld [vmem:[%s299 + $0xd8] sm:$0xff]
        %v739 = vld [vmem:[%s299 + $0xe0] sm:$0xff]
        %v740 = vld [vmem:[%s299 + $0xe8] sm:$0xff]
        %v741 = vld [vmem:[%s299 + $0xf0] sm:$0xff]
        %v742 = vld [vmem:[%s299 + $0xf8] sm:$0xff]
        %743 = vset.pattern.permute.xlu0 0
        %744 = vperm.xlu0 %743, %v711
        %v745 = vpop.permute.xlu0 %744
        %746 = vset.pattern.permute.xlu0 0
        %747 = vperm.xlu0 %746, %v712
        %v748 = vpop.permute.xlu0 %747
        %749 = vset.pattern.permute.xlu0 0
        %750 = vperm.xlu0 %749, %v713
        %v751 = vpop.permute.xlu0 %750
        %752 = vset.pattern.permute.xlu0 0
        %753 = vperm.xlu0 %752, %v714
        %v754 = vpop.permute.xlu0 %753
        %755 = vset.pattern.permute.xlu0 0
        %756 = vperm.xlu0 %755, %v715
        %v757 = vpop.permute.xlu0 %756
        %758 = vset.pattern.permute.xlu0 0
        %759 = vperm.xlu0 %758, %v716
        %v760 = vpop.permute.xlu0 %759
        %761 = vset.pattern.permute.xlu0 0
        %762 = vperm.xlu0 %761, %v717
        %v763 = vpop.permute.xlu0 %762
        %764 = vset.pattern.permute.xlu0 0
        %765 = vperm.xlu0 %764, %v718
        %v766 = vpop.permute.xlu0 %765
        %767 = vset.pattern.permute.xlu0 0
        %768 = vperm.xlu0 %767, %v719
        %v769 = vpop.permute.xlu0 %768
        %770 = vset.pattern.permute.xlu0 0
        %771 = vperm.xlu0 %770, %v720
        %v772 = vpop.permute.xlu0 %771
        %773 = vset.pattern.permute.xlu0 0
        %774 = vperm.xlu0 %773, %v721
        %v775 = vpop.permute.xlu0 %774
        %776 = vset.pattern.permute.xlu0 0
        %777 = vperm.xlu0 %776, %v722
        %v778 = vpop.permute.xlu0 %777
        %779 = vset.pattern.permute.xlu0 0
        %780 = vperm.xlu0 %779, %v723
        %v781 = vpop.permute.xlu0 %780
        %782 = vset.pattern.permute.xlu0 0
        %783 = vperm.xlu0 %782, %v724
        %v784 = vpop.permute.xlu0 %783
        %785 = vset.pattern.permute.xlu0 0
        %786 = vperm.xlu0 %785, %v725
        %v787 = vpop.permute.xlu0 %786
        %788 = vset.pattern.permute.xlu0 0
        %789 = vperm.xlu0 %788, %v726
        %v790 = vpop.permute.xlu0 %789
        %791 = vset.pattern.permute.xlu0 0
        %792 = vperm.xlu0 %791, %v727
        %v793 = vpop.permute.xlu0 %792
        %794 = vset.pattern.permute.xlu0 0
        %795 = vperm.xlu0 %794, %v728
        %v796 = vpop.permute.xlu0 %795
        %797 = vset.pattern.permute.xlu0 0
        %798 = vperm.xlu0 %797, %v729
        %v799 = vpop.permute.xlu0 %798
        %800 = vset.pattern.permute.xlu0 0
        %801 = vperm.xlu0 %800, %v730
        %v802 = vpop.permute.xlu0 %801
        %803 = vset.pattern.permute.xlu0 0
        %804 = vperm.xlu0 %803, %v731
        %v805 = vpop.permute.xlu0 %804
        %806 = vset.pattern.permute.xlu0 0
        %807 = vperm.xlu0 %806, %v732
        %v808 = vpop.permute.xlu0 %807
        %809 = vset.pattern.permute.xlu0 0
        %810 = vperm.xlu0 %809, %v733
        %v811 = vpop.permute.xlu0 %810
        %812 = vset.pattern.permute.xlu0 0
        %813 = vperm.xlu0 %812, %v734
        %v814 = vpop.permute.xlu0 %813
        %815 = vset.pattern.permute.xlu0 0
        %816 = vperm.xlu0 %815, %v735
        %v817 = vpop.permute.xlu0 %816
        %818 = vset.pattern.permute.xlu0 0
        %819 = vperm.xlu0 %818, %v736
        %v820 = vpop.permute.xlu0 %819
        %821 = vset.pattern.permute.xlu0 0
        %822 = vperm.xlu0 %821, %v737
        %v823 = vpop.permute.xlu0 %822
        %824 = vset.pattern.permute.xlu0 0
        %825 = vperm.xlu0 %824, %v738
        %v826 = vpop.permute.xlu0 %825
        %827 = vset.pattern.permute.xlu0 0
        %828 = vperm.xlu0 %827, %v739
        %v829 = vpop.permute.xlu0 %828
        %830 = vset.pattern.permute.xlu0 0
        %831 = vperm.xlu0 %830, %v740
        %v832 = vpop.permute.xlu0 %831
        %833 = vset.pattern.permute.xlu0 0
        %834 = vperm.xlu0 %833, %v741
        %v835 = vpop.permute.xlu0 %834
        %836 = vset.pattern.permute.xlu0 0
        %837 = vperm.xlu0 %836, %v742
        %v838 = vpop.permute.xlu0 %837
        %vm839 = vcmp.eq.s32.totalorder %v710, %v745
        %vm840 = vcmp.eq.s32.totalorder %v710, %v748
        %vm841 = vcmp.eq.s32.totalorder %v710, %v751
        %vm842 = vcmp.eq.s32.totalorder %v710, %v754
        %vm843 = vcmp.eq.s32.totalorder %v710, %v757
        %vm844 = vcmp.eq.s32.totalorder %v710, %v760
        %vm845 = vcmp.eq.s32.totalorder %v710, %v763
        %vm846 = vcmp.eq.s32.totalorder %v710, %v766
        %vm847 = vcmp.eq.s32.totalorder %v710, %v769
        %vm848 = vcmp.eq.s32.totalorder %v710, %v772
        %vm849 = vcmp.eq.s32.totalorder %v710, %v775
        %vm850 = vcmp.eq.s32.totalorder %v710, %v778
        %vm851 = vcmp.eq.s32.totalorder %v710, %v781
        %vm852 = vcmp.eq.s32.totalorder %v710, %v784
        %vm853 = vcmp.eq.s32.totalorder %v710, %v787
        %vm854 = vcmp.eq.s32.totalorder %v710, %v790
        %vm855 = vcmp.eq.s32.totalorder %v710, %v793
        %vm856 = vcmp.eq.s32.totalorder %v710, %v796
        %vm857 = vcmp.eq.s32.totalorder %v710, %v799
        %vm858 = vcmp.eq.s32.totalorder %v710, %v802
        %vm859 = vcmp.eq.s32.totalorder %v710, %v805
        %vm860 = vcmp.eq.s32.totalorder %v710, %v808
        %vm861 = vcmp.eq.s32.totalorder %v710, %v811
        %vm862 = vcmp.eq.s32.totalorder %v710, %v814
        %vm863 = vcmp.eq.s32.totalorder %v710, %v817
        %vm864 = vcmp.eq.s32.totalorder %v710, %v820
        %vm865 = vcmp.eq.s32.totalorder %v710, %v823
        %vm866 = vcmp.eq.s32.totalorder %v710, %v826
        %vm867 = vcmp.eq.s32.totalorder %v710, %v829
        %vm868 = vcmp.eq.s32.totalorder %v710, %v832
        %vm869 = vcmp.eq.s32.totalorder %v710, %v835
        %vm870 = vcmp.eq.s32.totalorder %v710, %v838
        %v871 = vsel %vm839, 1, 0
        %v872 = vsel %vm840, 1, 0
        %v873 = vsel %vm841, 1, 0
        %v874 = vsel %vm842, 1, 0
        %v875 = vsel %vm843, 1, 0
        %v876 = vsel %vm844, 1, 0
        %v877 = vsel %vm845, 1, 0
        %v878 = vsel %vm846, 1, 0
        %v879 = vsel %vm847, 1, 0
        %v880 = vsel %vm848, 1, 0
        %v881 = vsel %vm849, 1, 0
        %v882 = vsel %vm850, 1, 0
        %v883 = vsel %vm851, 1, 0
        %v884 = vsel %vm852, 1, 0
        %v885 = vsel %vm853, 1, 0
        %v886 = vsel %vm854, 1, 0
        %v887 = vsel %vm855, 1, 0
        %v888 = vsel %vm856, 1, 0
        %v889 = vsel %vm857, 1, 0
        %v890 = vsel %vm858, 1, 0
        %v891 = vsel %vm859, 1, 0
        %v892 = vsel %vm860, 1, 0
        %v893 = vsel %vm861, 1, 0
        %v894 = vsel %vm862, 1, 0
        %v895 = vsel %vm863, 1, 0
        %v896 = vsel %vm864, 1, 0
        %v897 = vsel %vm865, 1, 0
        %v898 = vsel %vm866, 1, 0
        %v899 = vsel %vm867, 1, 0
        %v900 = vsel %vm868, 1, 0
        %v901 = vsel %vm869, 1, 0
        %v902 = vsel %vm870, 1, 0
        %v903 = vcvt.s32.f32 %v871
        %v904 = vcvt.s32.f32 %v872
        %v905 = vcvt.s32.f32 %v873
        %v906 = vcvt.s32.f32 %v874
        %v907 = vcvt.s32.f32 %v875
        %v908 = vcvt.s32.f32 %v876
        %v909 = vcvt.s32.f32 %v877
        %v910 = vcvt.s32.f32 %v878
        %v911 = vcvt.s32.f32 %v879
        %v912 = vcvt.s32.f32 %v880
        %v913 = vcvt.s32.f32 %v881
        %v914 = vcvt.s32.f32 %v882
        %v915 = vcvt.s32.f32 %v883
        %v916 = vcvt.s32.f32 %v884
        %v917 = vcvt.s32.f32 %v885
        %v918 = vcvt.s32.f32 %v886
        %v919 = vcvt.s32.f32 %v887
        %v920 = vcvt.s32.f32 %v888
        %v921 = vcvt.s32.f32 %v889
        %v922 = vcvt.s32.f32 %v890
        %v923 = vcvt.s32.f32 %v891
        %v924 = vcvt.s32.f32 %v892
        %v925 = vcvt.s32.f32 %v893
        %v926 = vcvt.s32.f32 %v894
        %v927 = vcvt.s32.f32 %v895
        %v928 = vcvt.s32.f32 %v896
        %v929 = vcvt.s32.f32 %v897
        %v930 = vcvt.s32.f32 %v898
        %v931 = vcvt.s32.f32 %v899
        %v932 = vcvt.s32.f32 %v900
        %v933 = vcvt.s32.f32 %v901
        %v934 = vcvt.s32.f32 %v902
        // Predicated region
        $region53: #{tpu_custom_call.1} parent=47 // pred_check
          %p935 = pneg %p302
        $region54: #{tpu_custom_call.1} parent=47 // pred_check_branch
          %937 = sbr.rel (%p935) target = $region56
        $region55: #{tpu_custom_call.1} parent=47 // pred_region
          %v938 = vld [vmem:[#allocation2] sm:$0xff]
          %v939 = vpack.c.bf16 %v904, %v903
          %v940 = vpack.c.bf16 %v906, %v905
          %v941 = vpack.c.bf16 %v908, %v907
          %v942 = vpack.c.bf16 %v910, %v909
          %v943 = vpack.c.bf16 %v912, %v911
          %v944 = vpack.c.bf16 %v914, %v913
          %v945 = vpack.c.bf16 %v916, %v915
          %v946 = vpack.c.bf16 %v918, %v917
          %v947 = vpack.c.bf16 %v920, %v919
          %v948 = vpack.c.bf16 %v922, %v921
          %v949 = vpack.c.bf16 %v924, %v923
          %v950 = vpack.c.bf16 %v926, %v925
          %v951 = vpack.c.bf16 %v928, %v927
          %v952 = vpack.c.bf16 %v930, %v929
          %v953 = vpack.c.bf16 %v932, %v931
          %v954 = vpack.c.bf16 %v934, %v933
          %955 = vxpose.xlu0.c.b16.start [1/8] %v939, 128
          %956 = vxpose.xlu0.c.b16.cont [2/8] %v940, 128
          %957 = vxpose.xlu0.c.b16.cont [3/8] %v941, 128
          %958 = vxpose.xlu0.c.b16.cont [4/8] %v942, 128
          %959 = vxpose.xlu0.c.b16.cont [5/8] %v943, 128
          %960 = vxpose.xlu0.c.b16.cont [6/8] %v944, 128
          %961 = vxpose.xlu0.c.b16.cont [7/8] %v945, 128
          %962 = vxpose.xlu0.c.b16.end [8/8] %v946, 128
          %v963 = vpop.trf.xlu0
          %v964 = vpop.trf.xlu0
          %v965 = vpop.trf.xlu0
          %v966 = vpop.trf.xlu0
          %v967 = vpop.trf.xlu0
          %v968 = vpop.trf.xlu0
          %v969 = vpop.trf.xlu0
          %v970 = vpop.trf.xlu0
          %971 = vxpose.xlu0.c.b16.start [1/8] %v947, 128
          %972 = vxpose.xlu0.c.b16.cont [2/8] %v948, 128
          %973 = vxpose.xlu0.c.b16.cont [3/8] %v949, 128
          %974 = vxpose.xlu0.c.b16.cont [4/8] %v950, 128
          %975 = vxpose.xlu0.c.b16.cont [5/8] %v951, 128
          %976 = vxpose.xlu0.c.b16.cont [6/8] %v952, 128
          %977 = vxpose.xlu0.c.b16.cont [7/8] %v953, 128
          %978 = vxpose.xlu0.c.b16.end [8/8] %v954, 128
          %v979 = vpop.trf.xlu0
          %v980 = vpop.trf.xlu0
          %v981 = vpop.trf.xlu0
          %v982 = vpop.trf.xlu0
          %v983 = vpop.trf.xlu0
          %v984 = vpop.trf.xlu0
          %v985 = vpop.trf.xlu0
          %v986 = vpop.trf.xlu0
          %987 = vmatprep.subr.bf16.mxu0 0
          %988 = vmatpush1.bf16.msra.mxu0 %v693
          %989 = vmatprep.subr.bf16.mxu0 0
          %990 = vmatpush1.bf16.msra.mxu0 %v694
          %991 = vmatprep.subr.bf16.mxu0 0
          %992 = vmatpush1.bf16.msra.mxu0 %v695
          %993 = vmatprep.subr.bf16.mxu0 0
          %994 = vmatpush1.bf16.msra.mxu0 %v696
          %995 = vmatprep.subr.bf16.mxu0 0
          %996 = vmatpush1.bf16.msra.mxu0 %v697
          %997 = vmatprep.subr.bf16.mxu0 0
          %998 = vmatpush1.bf16.msra.mxu0 %v698
          %999 = vmatprep.subr.bf16.mxu0 0
          %1000 = vmatpush1.bf16.msra.mxu0 %v699
          %1001 = vmatprep.subr.bf16.mxu0 0
          %1002 = vmatpush1.bf16.msra.mxu0 %v700
          %1003 = vmatprep.subr.bf16.mxu0 0
          %1004 = vmatpush1.bf16.msra.mxu0 %v701
          %1005 = vmatprep.subr.bf16.mxu0 0
          %1006 = vmatpush1.bf16.msra.mxu0 %v702
          %1007 = vmatprep.subr.bf16.mxu0 0
          %1008 = vmatpush1.bf16.msra.mxu0 %v703
          %1009 = vmatprep.subr.bf16.mxu0 0
          %1010 = vmatpush1.bf16.msra.mxu0 %v704
          %1011 = vmatprep.subr.bf16.mxu0 0
          %1012 = vmatpush1.bf16.msra.mxu0 %v705
          %1013 = vmatprep.subr.bf16.mxu0 0
          %1014 = vmatpush1.bf16.msra.mxu0 %v706
          %1015 = vmatprep.subr.bf16.mxu0 0
          %1016 = vmatpush1.bf16.msra.mxu0 %v707
          %1017 = vmatprep.subr.bf16.mxu0 0
          %1018 = vmatpush1.bf16.msra.mxu0 %v708
          %1019 = vmatprep.mubr.bf16.mxu0 %v979
          %1020 = vmatmul.mubr.bf16.gmra.mrb[0].mxu0 %v963
          %v1021 = vpop.f32.mrb[0].mxu0
          %v1022 = vadd.f32 0.0, %v1021
          %v1023 = vpop.f32.mrb[0].mxu0
          %v1024 = vpop.f32.mrb[0].mxu0
          %v1025 = vpop.f32.mrb[0].mxu0
          %1026 = vdwg.mxu0
          %v1027 = vadd.f32 %v938, %v1022
          %1028 = vst [vmem:[#allocation2] sm:$0xff] %v1027
          %v1029 = vld [vmem:[#allocation3] sm:$0x1]
          %vm1030 = vcmask 64512
          %v1031 = vsel %vm1030, %v903, 0.0
          %v1032 = vsel %vm1030, %v904, 0.0
          %v1033 = vadd.f32 %v1031, %v1032
          %v1034 = vsel %vm1030, %v905, 0.0
          %v1035 = vadd.f32 %v1033, %v1034
          %v1036 = vsel %vm1030, %v906, 0.0
          %v1037 = vadd.f32 %v1035, %v1036
          %v1038 = vsel %vm1030, %v907, 0.0
          %v1039 = vadd.f32 %v1037, %v1038
          %v1040 = vsel %vm1030, %v908, 0.0
          %v1041 = vadd.f32 %v1039, %v1040
          %v1042 = vsel %vm1030, %v909, 0.0
          %v1043 = vadd.f32 %v1041, %v1042
          %v1044 = vsel %vm1030, %v910, 0.0
          %v1045 = vadd.f32 %v1043, %v1044
          %v1046 = vsel %vm1030, %v911, 0.0
          %v1047 = vadd.f32 %v1045, %v1046
          %v1048 = vsel %vm1030, %v912, 0.0
          %v1049 = vadd.f32 %v1047, %v1048
          %v1050 = vsel %vm1030, %v913, 0.0
          %v1051 = vadd.f32 %v1049, %v1050
          %v1052 = vsel %vm1030, %v914, 0.0
          %v1053 = vadd.f32 %v1051, %v1052
          %v1054 = vsel %vm1030, %v915, 0.0
          %v1055 = vadd.f32 %v1053, %v1054
          %v1056 = vsel %vm1030, %v916, 0.0
          %v1057 = vadd.f32 %v1055, %v1056
          %v1058 = vsel %vm1030, %v917, 0.0
          %v1059 = vadd.f32 %v1057, %v1058
          %v1060 = vsel %vm1030, %v918, 0.0
          %v1061 = vadd.f32 %v1059, %v1060
          %v1062 = vsel %vm1030, %v919, 0.0
          %v1063 = vadd.f32 %v1061, %v1062
          %v1064 = vsel %vm1030, %v920, 0.0
          %v1065 = vadd.f32 %v1063, %v1064
          %v1066 = vsel %vm1030, %v921, 0.0
          %v1067 = vadd.f32 %v1065, %v1066
          %v1068 = vsel %vm1030, %v922, 0.0
          %v1069 = vadd.f32 %v1067, %v1068
          %v1070 = vsel %vm1030, %v923, 0.0
          %v1071 = vadd.f32 %v1069, %v1070
          %v1072 = vsel %vm1030, %v924, 0.0
          %v1073 = vadd.f32 %v1071, %v1072
          %v1074 = vsel %vm1030, %v925, 0.0
          %v1075 = vadd.f32 %v1073, %v1074
          %v1076 = vsel %vm1030, %v926, 0.0
          %v1077 = vadd.f32 %v1075, %v1076
          %v1078 = vsel %vm1030, %v927, 0.0
          %v1079 = vadd.f32 %v1077, %v1078
          %v1080 = vsel %vm1030, %v928, 0.0
          %v1081 = vadd.f32 %v1079, %v1080
          %v1082 = vsel %vm1030, %v929, 0.0
          %v1083 = vadd.f32 %v1081, %v1082
          %v1084 = vsel %vm1030, %v930, 0.0
          %v1085 = vadd.f32 %v1083, %v1084
          %v1086 = vsel %vm1030, %v931, 0.0
          %v1087 = vadd.f32 %v1085, %v1086
          %v1088 = vsel %vm1030, %v932, 0.0
          %v1089 = vadd.f32 %v1087, %v1088
          %v1090 = vsel %vm1030, %v933, 0.0
          %v1091 = vadd.f32 %v1089, %v1090
          %v1092 = vsel %vm1030, %v934, 0.0
          %v1093 = vadd.f32 %v1091, %v1092
          %v1094 = vrot.slane %v1093, 4
          %v1095 = vadd.f32 %v1093, %v1094
          %v1096 = vrot.slane %v1095, 2
          %v1097 = vadd.f32 %v1095, %v1096
          %v1098 = vrot.slane %v1097, 1
          %v1099 = vadd.f32 %v1097, %v1098
          %v1100 = vadd.f32 %v1029, %v1099
          %vm1101 = vcmask 57344
          %1102 = vst.msk [vmem:[#allocation3] sm:$0x1] %vm1101, %v1100
          %p1103 = scmp.eq.s32.totalorder %s24, 1
          // Predicated region
          $region57: #{tpu_custom_call.1} parent=55 // pred_check
            %p1104 = pneg %p1103
          $region58: #{tpu_custom_call.1} parent=55 // pred_check_branch
            %1106 = sbr.rel (%p1104) target = $region60
          $region59: #{tpu_custom_call.1} parent=55 // pred_region
            %v1107 = vld [vmem:[#allocation3] sm:$0x1]
            %vm1108 = vcmp.gt.f32.partialorder %v1107, 0.0
            %v1109 = vrcp.pop %v1107
            %v1110 = vmul.f32 1.0, %v1109
            %v1111 = vsel %vm1108, %v1110, 0.0
            %1112 = vst.msk [vmem:[#allocation3] sm:$0x1] %vm1101, %v1111
          $region60: #{tpu_custom_call.1} parent=55 // pred_fallthru
            _
        $region56: #{tpu_custom_call.1} parent=47 // pred_fallthru
          _
        %p1113 = scmp.eq.s32.totalorder %s23, 1
        // Predicated region
        $region61: #{tpu_custom_call.1} parent=47 // pred_check
          %p1114 = pneg %p1113
        $region62: #{tpu_custom_call.1} parent=47 // pred_check_branch
          %1116 = sbr.rel (%p1114) target = $region64
        $region63: #{tpu_custom_call.1} parent=47 // pred_region
          // Predicated region
          $region65: #{tpu_custom_call.1} parent=63 // pred_check
            %p1117 = pneg %p303
          $region66: #{tpu_custom_call.1} parent=63 // pred_check_branch
            %1119 = sbr.rel (%p1117) target = $region68
          $region67: #{tpu_custom_call.1} parent=63 // pred_region
            %v1120 = vld [vmem:[#allocation2] sm:$0xff]
            %v1121 = vld [vmem:[%s5] sm:$0xff]
            %v1122 = vld [vmem:[%s5 + $0x8] sm:$0xff]
            %v1123 = vld [vmem:[%s5 + $0x10] sm:$0xff]
            %v1124 = vld [vmem:[%s5 + $0x18] sm:$0xff]
            %v1125 = vld [vmem:[%s5 + $0x20] sm:$0xff]
            %v1126 = vld [vmem:[%s5 + $0x28] sm:$0xff]
            %v1127 = vld [vmem:[%s5 + $0x30] sm:$0xff]
            %v1128 = vld [vmem:[%s5 + $0x38] sm:$0xff]
            %v1129 = vld [vmem:[%s5 + $0x40] sm:$0xff]
            %v1130 = vld [vmem:[%s5 + $0x48] sm:$0xff]
            %v1131 = vld [vmem:[%s5 + $0x50] sm:$0xff]
            %v1132 = vld [vmem:[%s5 + $0x58] sm:$0xff]
            %v1133 = vld [vmem:[%s5 + $0x60] sm:$0xff]
            %v1134 = vld [vmem:[%s5 + $0x68] sm:$0xff]
            %v1135 = vld [vmem:[%s5 + $0x70] sm:$0xff]
            %v1136 = vld [vmem:[%s5 + $0x78] sm:$0xff]
            %1137 = vmatprep.subr.mxu0 0.0
            %1138 = vmatpush1.msra.mxu0 %v1121
            %1139 = vmatprep.subr.mxu0 0.0
            %1140 = vmatpush1.msra.mxu0 %v1122
            %1141 = vmatprep.subr.mxu0 0.0
            %1142 = vmatpush1.msra.mxu0 %v1123
            %1143 = vmatprep.subr.mxu0 0.0
            %1144 = vmatpush1.msra.mxu0 %v1124
            %1145 = vmatprep.subr.mxu0 0.0
            %1146 = vmatpush1.msra.mxu0 %v1125
            %1147 = vmatprep.subr.mxu0 0.0
            %1148 = vmatpush1.msra.mxu0 %v1126
            %1149 = vmatprep.subr.mxu0 0.0
            %1150 = vmatpush1.msra.mxu0 %v1127
            %1151 = vmatprep.subr.mxu0 0.0
            %1152 = vmatpush1.msra.mxu0 %v1128
            %1153 = vmatprep.subr.mxu0 0.0
            %1154 = vmatpush1.msra.mxu0 %v1129
            %1155 = vmatprep.subr.mxu0 0.0
            %1156 = vmatpush1.msra.mxu0 %v1130
            %1157 = vmatprep.subr.mxu0 0.0
            %1158 = vmatpush1.msra.mxu0 %v1131
            %1159 = vmatprep.subr.mxu0 0.0
            %1160 = vmatpush1.msra.mxu0 %v1132
            %1161 = vmatprep.subr.mxu0 0.0
            %1162 = vmatpush1.msra.mxu0 %v1133
            %1163 = vmatprep.subr.mxu0 0.0
            %1164 = vmatpush1.msra.mxu0 %v1134
            %1165 = vmatprep.subr.mxu0 0.0
            %1166 = vmatpush1.msra.mxu0 %v1135
            %1167 = vmatprep.subr.mxu0 0.0
            %1168 = vmatpush1.msra.mxu0 %v1136
            %1169 = vmatprep.subr.mxu0 0.0
            %1170 = vmatpush1.msra.mxu0 0.0
            %1171 = vmatprep.subr.mxu0 0.0
            %1172 = vmatpush1.msra.mxu0 0.0
            %1173 = vmatprep.subr.mxu0 0.0
            %1174 = vmatpush1.msra.mxu0 0.0
            %1175 = vmatprep.subr.mxu0 0.0
            %1176 = vmatpush1.msra.mxu0 0.0
            %1177 = vmatprep.subr.mxu0 0.0
            %1178 = vmatpush1.msra.mxu0 0.0
            %1179 = vmatprep.subr.mxu0 0.0
            %1180 = vmatpush1.msra.mxu0 0.0
            %1181 = vmatprep.subr.mxu0 0.0
            %1182 = vmatpush1.msra.mxu0 0.0
            %1183 = vmatprep.subr.mxu0 0.0
            %1184 = vmatpush1.msra.mxu0 0.0
            %1185 = vmatprep.subr.mxu0 0.0
            %1186 = vmatpush1.msra.mxu0 0.0
            %1187 = vmatprep.subr.mxu0 0.0
            %1188 = vmatpush1.msra.mxu0 0.0
            %1189 = vmatprep.subr.mxu0 0.0
            %1190 = vmatpush1.msra.mxu0 0.0
            %1191 = vmatprep.subr.mxu0 0.0
            %1192 = vmatpush1.msra.mxu0 0.0
            %1193 = vmatprep.subr.mxu0 0.0
            %1194 = vmatpush1.msra.mxu0 0.0
            %1195 = vmatprep.subr.mxu0 0.0
            %1196 = vmatpush1.msra.mxu0 0.0
            %1197 = vmatprep.subr.mxu0 0.0
            %1198 = vmatpush1.msra.mxu0 0.0
            %1199 = vmatprep.subr.mxu0 0.0
            %1200 = vmatpush1.msra.mxu0 0.0
            %1201 = vmatprep.mubr.f32.mxu0 0.0
            %1202 = vmatmul.mubr.f32.gmra.mrb[0].mxu0 %v1120
            %v1203 = vpop.f32.mrb[0].mxu0
            %v1204 = vadd.f32 0.0, %v1203
            %v1205 = vpop.f32.mrb[0].mxu0
            %1206 = vdwg.mxu0
            %1207 = vst [vmem:[#allocation4] sm:$0xff] %v1204
          $region68: #{tpu_custom_call.1} parent=63 // pred_fallthru
            _
          %v1208 = vld [vmem:[#allocation3] sm:$0x1]
          %v1210 = vlaneseq
          %v1211 = vshrl.u32 %v1210, 7
          %v1212 = vsub.s32 0, %v1211
          %v1213 = vrot.slane %v1208, %v1212
          %v1215 = vmul.f32 %v903, %v1213
          %v1216 = vmul.f32 %v904, %v1213
          %v1217 = vmul.f32 %v905, %v1213
          %v1218 = vmul.f32 %v906, %v1213
          %v1219 = vmul.f32 %v907, %v1213
          %v1220 = vmul.f32 %v908, %v1213
          %v1221 = vmul.f32 %v909, %v1213
          %v1222 = vmul.f32 %v910, %v1213
          %v1223 = vmul.f32 %v911, %v1213
          %v1224 = vmul.f32 %v912, %v1213
          %v1225 = vmul.f32 %v913, %v1213
          %v1226 = vmul.f32 %v914, %v1213
          %v1227 = vmul.f32 %v915, %v1213
          %v1228 = vmul.f32 %v916, %v1213
          %v1229 = vmul.f32 %v917, %v1213
          %v1230 = vmul.f32 %v918, %v1213
          %v1231 = vmul.f32 %v919, %v1213
          %v1232 = vmul.f32 %v920, %v1213
          %v1233 = vmul.f32 %v921, %v1213
          %v1234 = vmul.f32 %v922, %v1213
          %v1235 = vmul.f32 %v923, %v1213
          %v1236 = vmul.f32 %v924, %v1213
          %v1237 = vmul.f32 %v925, %v1213
          %v1238 = vmul.f32 %v926, %v1213
          %v1239 = vmul.f32 %v927, %v1213
          %v1240 = vmul.f32 %v928, %v1213
          %v1241 = vmul.f32 %v929, %v1213
          %v1242 = vmul.f32 %v930, %v1213
          %v1243 = vmul.f32 %v931, %v1213
          %v1244 = vmul.f32 %v932, %v1213
          %v1245 = vmul.f32 %v933, %v1213
          %v1246 = vmul.f32 %v934, %v1213
          %v1247 = vld [vmem:[%s3] sm:$0xf]
          %v1248 = vld [vmem:[%s3 + $0x4] sm:$0xf]
          %v1249 = vld [vmem:[%s3 + $0x8] sm:$0xf]
          %v1250 = vld [vmem:[%s3 + $0xc] sm:$0xf]
          %v1251 = vld [vmem:[%s3 + $0x10] sm:$0xf]
          %v1252 = vld [vmem:[%s3 + $0x14] sm:$0xf]
          %v1253 = vld [vmem:[%s3 + $0x18] sm:$0xf]
          %v1254 = vld [vmem:[%s3 + $0x1c] sm:$0xf]
          %v1255 = vld [vmem:[%s3 + $0x20] sm:$0xf]
          %v1256 = vld [vmem:[%s3 + $0x24] sm:$0xf]
          %v1257 = vld [vmem:[%s3 + $0x28] sm:$0xf]
          %v1258 = vld [vmem:[%s3 + $0x2c] sm:$0xf]
          %v1259 = vld [vmem:[%s3 + $0x30] sm:$0xf]
          %v1260 = vld [vmem:[%s3 + $0x34] sm:$0xf]
          %v1261 = vld [vmem:[%s3 + $0x38] sm:$0xf]
          %v1262 = vld [vmem:[%s3 + $0x3c] sm:$0xf]
          %v1263 = vld [vmem:[%s4] sm:$0x1]
          %v1265 = vlaneseq
          %v1266 = vshrl.u32 %v1265, 7
          %v1267 = vsub.s32 0, %v1266
          %v1268 = vrot.slane %v1263, %v1267
          %v1286 = vunpack.c.l.b16 %v1247
          %v1287 = vunpack.c.l.b16 %v1248
          %v1288 = vunpack.c.l.b16 %v1249
          %v1289 = vunpack.c.l.b16 %v1250
          %v1290 = vunpack.c.l.b16 %v1251
          %v1291 = vunpack.c.l.b16 %v1252
          %v1292 = vunpack.c.l.b16 %v1253
          %v1293 = vunpack.c.l.b16 %v1254
          %v1294 = vunpack.c.l.b16 %v1255
          %v1295 = vunpack.c.l.b16 %v1256
          %v1296 = vunpack.c.l.b16 %v1257
          %v1297 = vunpack.c.l.b16 %v1258
          %v1298 = vunpack.c.l.b16 %v1259
          %v1299 = vunpack.c.l.b16 %v1260
          %v1300 = vunpack.c.l.b16 %v1261
          %v1301 = vunpack.c.l.b16 %v1262
          %v1302 = vpack.c.b16 %v1287, %v1286
          %v1303 = vpack.c.b16 %v1289, %v1288
          %v1304 = vpack.c.b16 %v1291, %v1290
          %v1305 = vpack.c.b16 %v1293, %v1292
          %v1306 = vpack.c.b16 %v1295, %v1294
          %v1307 = vpack.c.b16 %v1297, %v1296
          %v1308 = vpack.c.b16 %v1299, %v1298
          %v1309 = vpack.c.b16 %v1301, %v1300
          %1318 = vmatprep.subr.bf16.mxu0 0
          %1319 = vmatpush1.bf16.msra.mxu0 %v1302
          %1320 = vmatprep.subr.bf16.mxu0 0
          %1321 = vmatpush1.bf16.msra.mxu0 %v1303
          %1322 = vmatprep.subr.bf16.mxu0 0
          %1323 = vmatpush1.bf16.msra.mxu0 %v1304
          %1324 = vmatprep.subr.bf16.mxu0 0
          %1325 = vmatpush1.bf16.msra.mxu0 %v1305
          %1326 = vmatprep.subr.bf16.mxu0 0
          %1327 = vmatpush1.bf16.msra.mxu0 %v1306
          %1328 = vmatprep.subr.bf16.mxu0 0
          %1329 = vmatpush1.bf16.msra.mxu0 %v1307
          %1330 = vmatprep.subr.bf16.mxu0 0
          %1331 = vmatpush1.bf16.msra.mxu0 %v1308
          %1332 = vmatprep.subr.bf16.mxu0 0
          %1333 = vmatpush1.bf16.msra.mxu0 %v1309
          %1334 = vmatprep.subr.bf16.mxu0 0
          %1335 = vmatpush1.bf16.msra.mxu0 0
          %1336 = vmatprep.subr.bf16.mxu0 0
          %1337 = vmatpush1.bf16.msra.mxu0 0
          %1338 = vmatprep.subr.bf16.mxu0 0
          %1339 = vmatpush1.bf16.msra.mxu0 0
          %1340 = vmatprep.subr.bf16.mxu0 0
          %1341 = vmatpush1.bf16.msra.mxu0 0
          %1342 = vmatprep.subr.bf16.mxu0 0
          %1343 = vmatpush1.bf16.msra.mxu0 0
          %1344 = vmatprep.subr.bf16.mxu0 0
          %1345 = vmatpush1.bf16.msra.mxu0 0
          %1346 = vmatprep.subr.bf16.mxu0 0
          %1347 = vmatpush1.bf16.msra.mxu0 0
          %1348 = vmatprep.subr.bf16.mxu0 0
          %1349 = vmatpush1.bf16.msra.mxu0 0
          %1350 = vmatprep.mubr.bf16.mxu0 0
          %1351 = vmatmul.mubr.bf16.gmra.mrb[0].mxu0 %v693
          %v1352 = vpop.f32.mrb[0].mxu0
          %v1353 = vadd.f32 %v1268, %v1352
          %v1354 = vpop.f32.mrb[0].mxu0
          %v1355 = vpop.f32.mrb[0].mxu0
          %v1356 = vadd.f32 %v1268, %v1355
          %v1357 = vpop.f32.mrb[0].mxu0
          %1358 = vmatprep.mubr.bf16.mxu0 0
          %1359 = vmatmul.mubr.bf16.gmra.mrb[0].mxu0 %v694
          %v1360 = vpop.f32.mrb[0].mxu0
          %v1361 = vadd.f32 %v1268, %v1360
          %v1362 = vpop.f32.mrb[0].mxu0
          %v1363 = vpop.f32.mrb[0].mxu0
          %v1364 = vadd.f32 %v1268, %v1363
          %v1365 = vpop.f32.mrb[0].mxu0
          %1366 = vmatprep.mubr.bf16.mxu0 0
          %1367 = vmatmul.mubr.bf16.gmra.mrb[0].mxu0 %v695
          %v1368 = vpop.f32.mrb[0].mxu0
          %v1369 = vadd.f32 %v1268, %v1368
          %v1370 = vpop.f32.mrb[0].mxu0
          %v1371 = vpop.f32.mrb[0].mxu0
          %v1372 = vadd.f32 %v1268, %v1371
          %v1373 = vpop.f32.mrb[0].mxu0
          %1374 = vmatprep.mubr.bf16.mxu0 0
          %1375 = vmatmul.mubr.bf16.gmra.mrb[0].mxu0 %v696
          %v1376 = vpop.f32.mrb[0].mxu0
          %v1377 = vadd.f32 %v1268, %v1376
          %v1378 = vpop.f32.mrb[0].mxu0
          %v1379 = vpop.f32.mrb[0].mxu0
          %v1380 = vadd.f32 %v1268, %v1379
          %v1381 = vpop.f32.mrb[0].mxu0
          %1382 = vmatprep.mubr.bf16.mxu0 0
          %1383 = vmatmul.mubr.bf16.gmra.mrb[0].mxu0 %v697
          %v1384 = vpop.f32.mrb[0].mxu0
          %v1385 = vadd.f32 %v1268, %v1384
          %v1386 = vpop.f32.mrb[0].mxu0
          %v1387 = vpop.f32.mrb[0].mxu0
          %v1388 = vadd.f32 %v1268, %v1387
          %v1389 = vpop.f32.mrb[0].mxu0
          %1390 = vmatprep.mubr.bf16.mxu0 0
          %1391 = vmatmul.mubr.bf16.gmra.mrb[0].mxu0 %v698
          %v1392 = vpop.f32.mrb[0].mxu0
          %v1393 = vadd.f32 %v1268, %v1392
          %v1394 = vpop.f32.mrb[0].mxu0
          %v1395 = vpop.f32.mrb[0].mxu0
          %v1396 = vadd.f32 %v1268, %v1395
          %v1397 = vpop.f32.mrb[0].mxu0
          %1398 = vmatprep.mubr.bf16.mxu0 0
          %1399 = vmatmul.mubr.bf16.gmra.mrb[0].mxu0 %v699
          %v1400 = vpop.f32.mrb[0].mxu0
          %v1401 = vadd.f32 %v1268, %v1400
          %v1402 = vpop.f32.mrb[0].mxu0
          %v1403 = vpop.f32.mrb[0].mxu0
          %v1404 = vadd.f32 %v1268, %v1403
          %v1405 = vpop.f32.mrb[0].mxu0
          %1406 = vmatprep.mubr.bf16.mxu0 0
          %1407 = vmatmul.mubr.bf16.gmra.mrb[0].mxu0 %v700
          %v1408 = vpop.f32.mrb[0].mxu0
          %v1409 = vadd.f32 %v1268, %v1408
          %v1410 = vpop.f32.mrb[0].mxu0
          %v1411 = vpop.f32.mrb[0].mxu0
          %v1412 = vadd.f32 %v1268, %v1411
          %v1413 = vpop.f32.mrb[0].mxu0
          %1414 = vmatprep.mubr.bf16.mxu0 0
          %1415 = vmatmul.mubr.bf16.gmra.mrb[0].mxu0 %v701
          %v1416 = vpop.f32.mrb[0].mxu0
          %v1417 = vadd.f32 %v1268, %v1416
          %v1418 = vpop.f32.mrb[0].mxu0
          %v1419 = vpop.f32.mrb[0].mxu0
          %v1420 = vadd.f32 %v1268, %v1419
          %v1421 = vpop.f32.mrb[0].mxu0
          %1422 = vmatprep.mubr.bf16.mxu0 0
          %1423 = vmatmul.mubr.bf16.gmra.mrb[0].mxu0 %v702
          %v1424 = vpop.f32.mrb[0].mxu0
          %v1425 = vadd.f32 %v1268, %v1424
          %v1426 = vpop.f32.mrb[0].mxu0
          %v1427 = vpop.f32.mrb[0].mxu0
          %v1428 = vadd.f32 %v1268, %v1427
          %v1429 = vpop.f32.mrb[0].mxu0
          %1430 = vmatprep.mubr.bf16.mxu0 0
          %1431 = vmatmul.mubr.bf16.gmra.mrb[0].mxu0 %v703
          %v1432 = vpop.f32.mrb[0].mxu0
          %v1433 = vadd.f32 %v1268, %v1432
          %v1434 = vpop.f32.mrb[0].mxu0
          %v1435 = vpop.f32.mrb[0].mxu0
          %v1436 = vadd.f32 %v1268, %v1435
          %v1437 = vpop.f32.mrb[0].mxu0
          %1438 = vmatprep.mubr.bf16.mxu0 0
          %1439 = vmatmul.mubr.bf16.gmra.mrb[0].mxu0 %v704
          %v1440 = vpop.f32.mrb[0].mxu0
          %v1441 = vadd.f32 %v1268, %v1440
          %v1442 = vpop.f32.mrb[0].mxu0
          %v1443 = vpop.f32.mrb[0].mxu0
          %v1444 = vadd.f32 %v1268, %v1443
          %v1445 = vpop.f32.mrb[0].mxu0
          %1446 = vmatprep.mubr.bf16.mxu0 0
          %1447 = vmatmul.mubr.bf16.gmra.mrb[0].mxu0 %v705
          %v1448 = vpop.f32.mrb[0].mxu0
          %v1449 = vadd.f32 %v1268, %v1448
          %v1450 = vpop.f32.mrb[0].mxu0
          %v1451 = vpop.f32.mrb[0].mxu0
          %v1452 = vadd.f32 %v1268, %v1451
          %v1453 = vpop.f32.mrb[0].mxu0
          %1454 = vmatprep.mubr.bf16.mxu0 0
          %1455 = vmatmul.mubr.bf16.gmra.mrb[0].mxu0 %v706
          %v1456 = vpop.f32.mrb[0].mxu0
          %v1457 = vadd.f32 %v1268, %v1456
          %v1458 = vpop.f32.mrb[0].mxu0
          %v1459 = vpop.f32.mrb[0].mxu0
          %v1460 = vadd.f32 %v1268, %v1459
          %v1461 = vpop.f32.mrb[0].mxu0
          %1462 = vmatprep.mubr.bf16.mxu0 0
          %1463 = vmatmul.mubr.bf16.gmra.mrb[0].mxu0 %v707
          %v1464 = vpop.f32.mrb[0].mxu0
          %v1465 = vadd.f32 %v1268, %v1464
          %v1466 = vpop.f32.mrb[0].mxu0
          %v1467 = vpop.f32.mrb[0].mxu0
          %v1468 = vadd.f32 %v1268, %v1467
          %v1469 = vpop.f32.mrb[0].mxu0
          %1470 = vmatprep.mubr.bf16.mxu0 0
          %1471 = vmatmul.mubr.bf16.gmra.mrb[0].mxu0 %v708
          %v1472 = vpop.f32.mrb[0].mxu0
          %v1473 = vadd.f32 %v1268, %v1472
          %v1474 = vpop.f32.mrb[0].mxu0
          %v1475 = vpop.f32.mrb[0].mxu0
          %v1476 = vadd.f32 %v1268, %v1475
          %v1477 = vpop.f32.mrb[0].mxu0
          %1478 = vdwg.mxu0
          %v1479 = vld [vmem:[#allocation4] sm:$0xff]
          %vm1480 = vcmask 64512
          %v1482 = vsel %vm1480, %v1215, 0
          %v1485 = vsel %vm1480, %v1216, 0
          %v1488 = vsel %vm1480, %v1217, 0
          %v1491 = vsel %vm1480, %v1218, 0
          %v1494 = vsel %vm1480, %v1219, 0
          %v1497 = vsel %vm1480, %v1220, 0
          %v1500 = vsel %vm1480, %v1221, 0
          %v1503 = vsel %vm1480, %v1222, 0
          %v1506 = vsel %vm1480, %v1223, 0
          %v1509 = vsel %vm1480, %v1224, 0
          %v1512 = vsel %vm1480, %v1225, 0
          %v1515 = vsel %vm1480, %v1226, 0
          %v1518 = vsel %vm1480, %v1227, 0
          %v1521 = vsel %vm1480, %v1228, 0
          %v1524 = vsel %vm1480, %v1229, 0
          %v1527 = vsel %vm1480, %v1230, 0
          %v1530 = vsel %vm1480, %v1231, 0
          %v1533 = vsel %vm1480, %v1232, 0
          %v1536 = vsel %vm1480, %v1233, 0
          %v1539 = vsel %vm1480, %v1234, 0
          %v1542 = vsel %vm1480, %v1235, 0
          %v1545 = vsel %vm1480, %v1236, 0
          %v1548 = vsel %vm1480, %v1237, 0
          %v1551 = vsel %vm1480, %v1238, 0
          %v1554 = vsel %vm1480, %v1239, 0
          %v1557 = vsel %vm1480, %v1240, 0
          %v1560 = vsel %vm1480, %v1241, 0
          %v1563 = vsel %vm1480, %v1242, 0
          %v1566 = vsel %vm1480, %v1243, 0
          %v1569 = vsel %vm1480, %v1244, 0
          %v1572 = vsel %vm1480, %v1245, 0
          %v1575 = vsel %vm1480, %v1246, 0
          %1577 = vmatprep.subr.mxu0 0.0
          %1578 = vmatpush1.msra.mxu0 %v1479
          %1579 = vmatprep.subr.mxu0 0.0
          %1580 = vmatpush1.msra.mxu0 0.0
          %1581 = vmatprep.subr.mxu0 0.0
          %1582 = vmatpush1.msra.mxu0 0.0
          %1583 = vmatprep.subr.mxu0 0.0
          %1584 = vmatpush1.msra.mxu0 0.0
          %1585 = vmatprep.subr.mxu0 0.0
          %1586 = vmatpush1.msra.mxu0 0.0
          %1587 = vmatprep.subr.mxu0 0.0
          %1588 = vmatpush1.msra.mxu0 0.0
          %1589 = vmatprep.subr.mxu0 0.0
          %1590 = vmatpush1.msra.mxu0 0.0
          %1591 = vmatprep.subr.mxu0 0.0
          %1592 = vmatpush1.msra.mxu0 0.0
          %1593 = vmatprep.subr.mxu0 0.0
          %1594 = vmatpush1.msra.mxu0 0.0
          %1595 = vmatprep.subr.mxu0 0.0
          %1596 = vmatpush1.msra.mxu0 0.0
          %1597 = vmatprep.subr.mxu0 0.0
          %1598 = vmatpush1.msra.mxu0 0.0
          %1599 = vmatprep.subr.mxu0 0.0
          %1600 = vmatpush1.msra.mxu0 0.0
          %1601 = vmatprep.subr.mxu0 0.0
          %1602 = vmatpush1.msra.mxu0 0.0
          %1603 = vmatprep.subr.mxu0 0.0
          %1604 = vmatpush1.msra.mxu0 0.0
          %1605 = vmatprep.subr.mxu0 0.0
          %1606 = vmatpush1.msra.mxu0 0.0
          %1607 = vmatprep.subr.mxu0 0.0
          %1608 = vmatpush1.msra.mxu0 0.0
          %1609 = vmatprep.subr.mxu0 0.0
          %1610 = vmatpush1.msra.mxu0 0.0
          %1611 = vmatprep.subr.mxu0 0.0
          %1612 = vmatpush1.msra.mxu0 0.0
          %1613 = vmatprep.subr.mxu0 0.0
          %1614 = vmatpush1.msra.mxu0 0.0
          %1615 = vmatprep.subr.mxu0 0.0
          %1616 = vmatpush1.msra.mxu0 0.0
          %1617 = vmatprep.subr.mxu0 0.0
          %1618 = vmatpush1.msra.mxu0 0.0
          %1619 = vmatprep.subr.mxu0 0.0
          %1620 = vmatpush1.msra.mxu0 0.0
          %1621 = vmatprep.subr.mxu0 0.0
          %1622 = vmatpush1.msra.mxu0 0.0
          %1623 = vmatprep.subr.mxu0 0.0
          %1624 = vmatpush1.msra.mxu0 0.0
          %1625 = vmatprep.subr.mxu0 0.0
          %1626 = vmatpush1.msra.mxu0 0.0
          %1627 = vmatprep.subr.mxu0 0.0
          %1628 = vmatpush1.msra.mxu0 0.0
          %1629 = vmatprep.subr.mxu0 0.0
          %1630 = vmatpush1.msra.mxu0 0.0
          %1631 = vmatprep.subr.mxu0 0.0
          %1632 = vmatpush1.msra.mxu0 0.0
          %1633 = vmatprep.subr.mxu0 0.0
          %1634 = vmatpush1.msra.mxu0 0.0
          %1635 = vmatprep.subr.mxu0 0.0
          %1636 = vmatpush1.msra.mxu0 0.0
          %1637 = vmatprep.subr.mxu0 0.0
          %1638 = vmatpush1.msra.mxu0 0.0
          %1639 = vmatprep.subr.mxu0 0.0
          %1640 = vmatpush1.msra.mxu0 0.0
          %1641 = vmatprep.mubr.f32.mxu0 0.0
          %1642 = vmatmul.mubr.f32.gmra.mrb[0].mxu0 %v1482
          %v1643 = vpop.f32.mrb[0].mxu0
          %v1644 = vadd.f32 0.0, %v1643
          %v1645 = vpop.f32.mrb[0].mxu0
          %1646 = vmatprep.mubr.f32.mxu0 0.0
          %1647 = vmatmul.mubr.f32.gmra.mrb[0].mxu0 %v1485
          %v1648 = vpop.f32.mrb[0].mxu0
          %v1649 = vadd.f32 0.0, %v1648
          %v1650 = vpop.f32.mrb[0].mxu0
          %1651 = vmatprep.mubr.f32.mxu0 0.0
          %1652 = vmatmul.mubr.f32.gmra.mrb[0].mxu0 %v1488
          %v1653 = vpop.f32.mrb[0].mxu0
          %v1654 = vadd.f32 0.0, %v1653
          %v1655 = vpop.f32.mrb[0].mxu0
          %1656 = vmatprep.mubr.f32.mxu0 0.0
          %1657 = vmatmul.mubr.f32.gmra.mrb[0].mxu0 %v1491
          %v1658 = vpop.f32.mrb[0].mxu0
          %v1659 = vadd.f32 0.0, %v1658
          %v1660 = vpop.f32.mrb[0].mxu0
          %1661 = vmatprep.mubr.f32.mxu0 0.0
          %1662 = vmatmul.mubr.f32.gmra.mrb[0].mxu0 %v1494
          %v1663 = vpop.f32.mrb[0].mxu0
          %v1664 = vadd.f32 0.0, %v1663
          %v1665 = vpop.f32.mrb[0].mxu0
          %1666 = vmatprep.mubr.f32.mxu0 0.0
          %1667 = vmatmul.mubr.f32.gmra.mrb[0].mxu0 %v1497
          %v1668 = vpop.f32.mrb[0].mxu0
          %v1669 = vadd.f32 0.0, %v1668
          %v1670 = vpop.f32.mrb[0].mxu0
          %1671 = vmatprep.mubr.f32.mxu0 0.0
          %1672 = vmatmul.mubr.f32.gmra.mrb[0].mxu0 %v1500
          %v1673 = vpop.f32.mrb[0].mxu0
          %v1674 = vadd.f32 0.0, %v1673
          %v1675 = vpop.f32.mrb[0].mxu0
          %1676 = vmatprep.mubr.f32.mxu0 0.0
          %1677 = vmatmul.mubr.f32.gmra.mrb[0].mxu0 %v1503
          %v1678 = vpop.f32.mrb[0].mxu0
          %v1679 = vadd.f32 0.0, %v1678
          %v1680 = vpop.f32.mrb[0].mxu0
          %1681 = vmatprep.mubr.f32.mxu0 0.0
          %1682 = vmatmul.mubr.f32.gmra.mrb[0].mxu0 %v1506
          %v1683 = vpop.f32.mrb[0].mxu0
          %v1684 = vadd.f32 0.0, %v1683
          %v1685 = vpop.f32.mrb[0].mxu0
          %1686 = vmatprep.mubr.f32.mxu0 0.0
          %1687 = vmatmul.mubr.f32.gmra.mrb[0].mxu0 %v1509
          %v1688 = vpop.f32.mrb[0].mxu0
          %v1689 = vadd.f32 0.0, %v1688
          %v1690 = vpop.f32.mrb[0].mxu0
          %1691 = vmatprep.mubr.f32.mxu0 0.0
          %1692 = vmatmul.mubr.f32.gmra.mrb[0].mxu0 %v1512
          %v1693 = vpop.f32.mrb[0].mxu0
          %v1694 = vadd.f32 0.0, %v1693
          %v1695 = vpop.f32.mrb[0].mxu0
          %1696 = vmatprep.mubr.f32.mxu0 0.0
          %1697 = vmatmul.mubr.f32.gmra.mrb[0].mxu0 %v1515
          %v1698 = vpop.f32.mrb[0].mxu0
          %v1699 = vadd.f32 0.0, %v1698
          %v1700 = vpop.f32.mrb[0].mxu0
          %1701 = vmatprep.mubr.f32.mxu0 0.0
          %1702 = vmatmul.mubr.f32.gmra.mrb[0].mxu0 %v1518
          %v1703 = vpop.f32.mrb[0].mxu0
          %v1704 = vadd.f32 0.0, %v1703
          %v1705 = vpop.f32.mrb[0].mxu0
          %1706 = vmatprep.mubr.f32.mxu0 0.0
          %1707 = vmatmul.mubr.f32.gmra.mrb[0].mxu0 %v1521
          %v1708 = vpop.f32.mrb[0].mxu0
          %v1709 = vadd.f32 0.0, %v1708
          %v1710 = vpop.f32.mrb[0].mxu0
          %1711 = vmatprep.mubr.f32.mxu0 0.0
          %1712 = vmatmul.mubr.f32.gmra.mrb[0].mxu0 %v1524
          %v1713 = vpop.f32.mrb[0].mxu0
          %v1714 = vadd.f32 0.0, %v1713
          %v1715 = vpop.f32.mrb[0].mxu0
          %1716 = vmatprep.mubr.f32.mxu0 0.0
          %1717 = vmatmul.mubr.f32.gmra.mrb[0].mxu0 %v1527
          %v1718 = vpop.f32.mrb[0].mxu0
          %v1719 = vadd.f32 0.0, %v1718
          %v1720 = vpop.f32.mrb[0].mxu0
          %1721 = vmatprep.mubr.f32.mxu0 0.0
          %1722 = vmatmul.mubr.f32.gmra.mrb[0].mxu0 %v1530
          %v1723 = vpop.f32.mrb[0].mxu0
          %v1724 = vadd.f32 0.0, %v1723
          %v1725 = vpop.f32.mrb[0].mxu0
          %1726 = vmatprep.mubr.f32.mxu0 0.0
          %1727 = vmatmul.mubr.f32.gmra.mrb[0].mxu0 %v1533
          %v1728 = vpop.f32.mrb[0].mxu0
          %v1729 = vadd.f32 0.0, %v1728
          %v1730 = vpop.f32.mrb[0].mxu0
          %1731 = vmatprep.mubr.f32.mxu0 0.0
          %1732 = vmatmul.mubr.f32.gmra.mrb[0].mxu0 %v1536
          %v1733 = vpop.f32.mrb[0].mxu0
          %v1734 = vadd.f32 0.0, %v1733
          %v1735 = vpop.f32.mrb[0].mxu0
          %1736 = vmatprep.mubr.f32.mxu0 0.0
          %1737 = vmatmul.mubr.f32.gmra.mrb[0].mxu0 %v1539
          %v1738 = vpop.f32.mrb[0].mxu0
          %v1739 = vadd.f32 0.0, %v1738
          %v1740 = vpop.f32.mrb[0].mxu0
          %1741 = vmatprep.mubr.f32.mxu0 0.0
          %1742 = vmatmul.mubr.f32.gmra.mrb[0].mxu0 %v1542
          %v1743 = vpop.f32.mrb[0].mxu0
          %v1744 = vadd.f32 0.0, %v1743
          %v1745 = vpop.f32.mrb[0].mxu0
          %1746 = vmatprep.mubr.f32.mxu0 0.0
          %1747 = vmatmul.mubr.f32.gmra.mrb[0].mxu0 %v1545
          %v1748 = vpop.f32.mrb[0].mxu0
          %v1749 = vadd.f32 0.0, %v1748
          %v1750 = vpop.f32.mrb[0].mxu0
          %1751 = vmatprep.mubr.f32.mxu0 0.0
          %1752 = vmatmul.mubr.f32.gmra.mrb[0].mxu0 %v1548
          %v1753 = vpop.f32.mrb[0].mxu0
          %v1754 = vadd.f32 0.0, %v1753
          %v1755 = vpop.f32.mrb[0].mxu0
          %1756 = vmatprep.mubr.f32.mxu0 0.0
          %1757 = vmatmul.mubr.f32.gmra.mrb[0].mxu0 %v1551
          %v1758 = vpop.f32.mrb[0].mxu0
          %v1759 = vadd.f32 0.0, %v1758
          %v1760 = vpop.f32.mrb[0].mxu0
          %1761 = vmatprep.mubr.f32.mxu0 0.0
          %1762 = vmatmul.mubr.f32.gmra.mrb[0].mxu0 %v1554
          %v1763 = vpop.f32.mrb[0].mxu0
          %v1764 = vadd.f32 0.0, %v1763
          %v1765 = vpop.f32.mrb[0].mxu0
          %1766 = vmatprep.mubr.f32.mxu0 0.0
          %1767 = vmatmul.mubr.f32.gmra.mrb[0].mxu0 %v1557
          %v1768 = vpop.f32.mrb[0].mxu0
          %v1769 = vadd.f32 0.0, %v1768
          %v1770 = vpop.f32.mrb[0].mxu0
          %1771 = vmatprep.mubr.f32.mxu0 0.0
          %1772 = vmatmul.mubr.f32.gmra.mrb[0].mxu0 %v1560
          %v1773 = vpop.f32.mrb[0].mxu0
          %v1774 = vadd.f32 0.0, %v1773
          %v1775 = vpop.f32.mrb[0].mxu0
          %1776 = vmatprep.mubr.f32.mxu0 0.0
          %1777 = vmatmul.mubr.f32.gmra.mrb[0].mxu0 %v1563
          %v1778 = vpop.f32.mrb[0].mxu0
          %v1779 = vadd.f32 0.0, %v1778
          %v1780 = vpop.f32.mrb[0].mxu0
          %1781 = vmatprep.mubr.f32.mxu0 0.0
          %1782 = vmatmul.mubr.f32.gmra.mrb[0].mxu0 %v1566
          %v1783 = vpop.f32.mrb[0].mxu0
          %v1784 = vadd.f32 0.0, %v1783
          %v1785 = vpop.f32.mrb[0].mxu0
          %1786 = vmatprep.mubr.f32.mxu0 0.0
          %1787 = vmatmul.mubr.f32.gmra.mrb[0].mxu0 %v1569
          %v1788 = vpop.f32.mrb[0].mxu0
          %v1789 = vadd.f32 0.0, %v1788
          %v1790 = vpop.f32.mrb[0].mxu0
          %1791 = vmatprep.mubr.f32.mxu0 0.0
          %1792 = vmatmul.mubr.f32.gmra.mrb[0].mxu0 %v1572
          %v1793 = vpop.f32.mrb[0].mxu0
          %v1794 = vadd.f32 0.0, %v1793
          %v1795 = vpop.f32.mrb[0].mxu0
          %1796 = vmatprep.mubr.f32.mxu0 0.0
          %1797 = vmatmul.mubr.f32.gmra.mrb[0].mxu0 %v1575
          %v1798 = vpop.f32.mrb[0].mxu0
          %v1799 = vadd.f32 0.0, %v1798
          %v1800 = vpop.f32.mrb[0].mxu0
          %1801 = vdwg.mxu0
          %v1802 = vadd.f32 %v1353, %v1644
          %v1803 = vadd.f32 %v1356, %v1649
          %v1804 = vadd.f32 %v1361, %v1654
          %v1805 = vadd.f32 %v1364, %v1659
          %v1806 = vadd.f32 %v1369, %v1664
          %v1807 = vadd.f32 %v1372, %v1669
          %v1808 = vadd.f32 %v1377, %v1674
          %v1809 = vadd.f32 %v1380, %v1679
          %v1810 = vadd.f32 %v1385, %v1684
          %v1811 = vadd.f32 %v1388, %v1689
          %v1812 = vadd.f32 %v1393, %v1694
          %v1813 = vadd.f32 %v1396, %v1699
          %v1814 = vadd.f32 %v1401, %v1704
          %v1815 = vadd.f32 %v1404, %v1709
          %v1816 = vadd.f32 %v1409, %v1714
          %v1817 = vadd.f32 %v1412, %v1719
          %v1818 = vadd.f32 %v1417, %v1724
          %v1819 = vadd.f32 %v1420, %v1729
          %v1820 = vadd.f32 %v1425, %v1734
          %v1821 = vadd.f32 %v1428, %v1739
          %v1822 = vadd.f32 %v1433, %v1744
          %v1823 = vadd.f32 %v1436, %v1749
          %v1824 = vadd.f32 %v1441, %v1754
          %v1825 = vadd.f32 %v1444, %v1759
          %v1826 = vadd.f32 %v1449, %v1764
          %v1827 = vadd.f32 %v1452, %v1769
          %v1828 = vadd.f32 %v1457, %v1774
          %v1829 = vadd.f32 %v1460, %v1779
          %v1830 = vadd.f32 %v1465, %v1784
          %v1831 = vadd.f32 %v1468, %v1789
          %v1832 = vadd.f32 %v1473, %v1794
          %v1833 = vadd.f32 %v1476, %v1799
          %v1834 = vxor.u32 %v1802, 2147483648
          %v1835 = vxor.u32 %v1803, 2147483648
          %v1836 = vxor.u32 %v1804, 2147483648
          %v1837 = vxor.u32 %v1805, 2147483648
          %v1838 = vxor.u32 %v1806, 2147483648
          %v1839 = vxor.u32 %v1807, 2147483648
          %v1840 = vxor.u32 %v1808, 2147483648
          %v1841 = vxor.u32 %v1809, 2147483648
          %v1842 = vxor.u32 %v1810, 2147483648
          %v1843 = vxor.u32 %v1811, 2147483648
          %v1844 = vxor.u32 %v1812, 2147483648
          %v1845 = vxor.u32 %v1813, 2147483648
          %v1846 = vxor.u32 %v1814, 2147483648
          %v1847 = vxor.u32 %v1815, 2147483648
          %v1848 = vxor.u32 %v1816, 2147483648
          %v1849 = vxor.u32 %v1817, 2147483648
          %v1850 = vxor.u32 %v1818, 2147483648
          %v1851 = vxor.u32 %v1819, 2147483648
          %v1852 = vxor.u32 %v1820, 2147483648
          %v1853 = vxor.u32 %v1821, 2147483648
          %v1854 = vxor.u32 %v1822, 2147483648
          %v1855 = vxor.u32 %v1823, 2147483648
          %v1856 = vxor.u32 %v1824, 2147483648
          %v1857 = vxor.u32 %v1825, 2147483648
          %v1858 = vxor.u32 %v1826, 2147483648
          %v1859 = vxor.u32 %v1827, 2147483648
          %v1860 = vxor.u32 %v1828, 2147483648
          %v1861 = vxor.u32 %v1829, 2147483648
          %v1862 = vxor.u32 %v1830, 2147483648
          %v1863 = vxor.u32 %v1831, 2147483648
          %v1864 = vxor.u32 %v1832, 2147483648
          %v1865 = vxor.u32 %v1833, 2147483648
          %v1866 = vmul.f32 %v1834, 1.442695
          %v1867 = vpow.pop %v1866
          %v1868 = vmul.f32 %v1835, 1.442695
          %v1869 = vpow.pop %v1868
          %v1870 = vmul.f32 %v1836, 1.442695
          %v1871 = vpow.pop %v1870
          %v1872 = vmul.f32 %v1837, 1.442695
          %v1873 = vpow.pop %v1872
          %v1874 = vmul.f32 %v1838, 1.442695
          %v1875 = vpow.pop %v1874
          %v1876 = vmul.f32 %v1839, 1.442695
          %v1877 = vpow.pop %v1876
          %v1878 = vmul.f32 %v1840, 1.442695
          %v1879 = vpow.pop %v1878
          %v1880 = vmul.f32 %v1841, 1.442695
          %v1881 = vpow.pop %v1880
          %v1882 = vmul.f32 %v1842, 1.442695
          %v1883 = vpow.pop %v1882
          %v1884 = vmul.f32 %v1843, 1.442695
          %v1885 = vpow.pop %v1884
          %v1886 = vmul.f32 %v1844, 1.442695
          %v1887 = vpow.pop %v1886
          %v1888 = vmul.f32 %v1845, 1.442695
          %v1889 = vpow.pop %v1888
          %v1890 = vmul.f32 %v1846, 1.442695
          %v1891 = vpow.pop %v1890
          %v1892 = vmul.f32 %v1847, 1.442695
          %v1893 = vpow.pop %v1892
          %v1894 = vmul.f32 %v1848, 1.442695
          %v1895 = vpow.pop %v1894
          %v1896 = vmul.f32 %v1849, 1.442695
          %v1897 = vpow.pop %v1896
          %v1898 = vmul.f32 %v1850, 1.442695
          %v1899 = vpow.pop %v1898
          %v1900 = vmul.f32 %v1851, 1.442695
          %v1901 = vpow.pop %v1900
          %v1902 = vmul.f32 %v1852, 1.442695
          %v1903 = vpow.pop %v1902
          %v1904 = vmul.f32 %v1853, 1.442695
          %v1905 = vpow.pop %v1904
          %v1906 = vmul.f32 %v1854, 1.442695
          %v1907 = vpow.pop %v1906
          %v1908 = vmul.f32 %v1855, 1.442695
          %v1909 = vpow.pop %v1908
          %v1910 = vmul.f32 %v1856, 1.442695
          %v1911 = vpow.pop %v1910
          %v1912 = vmul.f32 %v1857, 1.442695
          %v1913 = vpow.pop %v1912
          %v1914 = vmul.f32 %v1858, 1.442695
          %v1915 = vpow.pop %v1914
          %v1916 = vmul.f32 %v1859, 1.442695
          %v1917 = vpow.pop %v1916
          %v1918 = vmul.f32 %v1860, 1.442695
          %v1919 = vpow.pop %v1918
          %v1920 = vmul.f32 %v1861, 1.442695
          %v1921 = vpow.pop %v1920
          %v1922 = vmul.f32 %v1862, 1.442695
          %v1923 = vpow.pop %v1922
          %v1924 = vmul.f32 %v1863, 1.442695
          %v1925 = vpow.pop %v1924
          %v1926 = vmul.f32 %v1864, 1.442695
          %v1927 = vpow.pop %v1926
          %v1928 = vmul.f32 %v1865, 1.442695
          %v1929 = vpow.pop %v1928
          %v1930 = vadd.f32 %v1867, 1.0
          %v1931 = vadd.f32 %v1869, 1.0
          %v1932 = vadd.f32 %v1871, 1.0
          %v1933 = vadd.f32 %v1873, 1.0
          %v1934 = vadd.f32 %v1875, 1.0
          %v1935 = vadd.f32 %v1877, 1.0
          %v1936 = vadd.f32 %v1879, 1.0
          %v1937 = vadd.f32 %v1881, 1.0
          %v1938 = vadd.f32 %v1883, 1.0
          %v1939 = vadd.f32 %v1885, 1.0
          %v1940 = vadd.f32 %v1887, 1.0
          %v1941 = vadd.f32 %v1889, 1.0
          %v1942 = vadd.f32 %v1891, 1.0
          %v1943 = vadd.f32 %v1893, 1.0
          %v1944 = vadd.f32 %v1895, 1.0
          %v1945 = vadd.f32 %v1897, 1.0
          %v1946 = vadd.f32 %v1899, 1.0
          %v1947 = vadd.f32 %v1901, 1.0
          %v1948 = vadd.f32 %v1903, 1.0
          %v1949 = vadd.f32 %v1905, 1.0
          %v1950 = vadd.f32 %v1907, 1.0
          %v1951 = vadd.f32 %v1909, 1.0
          %v1952 = vadd.f32 %v1911, 1.0
          %v1953 = vadd.f32 %v1913, 1.0
          %v1954 = vadd.f32 %v1915, 1.0
          %v1955 = vadd.f32 %v1917, 1.0
          %v1956 = vadd.f32 %v1919, 1.0
          %v1957 = vadd.f32 %v1921, 1.0
          %v1958 = vadd.f32 %v1923, 1.0
          %v1959 = vadd.f32 %v1925, 1.0
          %v1960 = vadd.f32 %v1927, 1.0
          %v1961 = vadd.f32 %v1929, 1.0
          %v1962 = vrcp.pop %v1930
          %v1963 = vmul.f32 1.0, %v1962
          %v1964 = vrcp.pop %v1931
          %v1965 = vmul.f32 1.0, %v1964
          %v1966 = vrcp.pop %v1932
          %v1967 = vmul.f32 1.0, %v1966
          %v1968 = vrcp.pop %v1933
          %v1969 = vmul.f32 1.0, %v1968
          %v1970 = vrcp.pop %v1934
          %v1971 = vmul.f32 1.0, %v1970
          %v1972 = vrcp.pop %v1935
          %v1973 = vmul.f32 1.0, %v1972
          %v1974 = vrcp.pop %v1936
          %v1975 = vmul.f32 1.0, %v1974
          %v1976 = vrcp.pop %v1937
          %v1977 = vmul.f32 1.0, %v1976
          %v1978 = vrcp.pop %v1938
          %v1979 = vmul.f32 1.0, %v1978
          %v1980 = vrcp.pop %v1939
          %v1981 = vmul.f32 1.0, %v1980
          %v1982 = vrcp.pop %v1940
          %v1983 = vmul.f32 1.0, %v1982
          %v1984 = vrcp.pop %v1941
          %v1985 = vmul.f32 1.0, %v1984
          %v1986 = vrcp.pop %v1942
          %v1987 = vmul.f32 1.0, %v1986
          %v1988 = vrcp.pop %v1943
          %v1989 = vmul.f32 1.0, %v1988
          %v1990 = vrcp.pop %v1944
          %v1991 = vmul.f32 1.0, %v1990
          %v1992 = vrcp.pop %v1945
          %v1993 = vmul.f32 1.0, %v1992
          %v1994 = vrcp.pop %v1946
          %v1995 = vmul.f32 1.0, %v1994
          %v1996 = vrcp.pop %v1947
          %v1997 = vmul.f32 1.0, %v1996
          %v1998 = vrcp.pop %v1948
          %v1999 = vmul.f32 1.0, %v1998
          %v2000 = vrcp.pop %v1949
          %v2001 = vmul.f32 1.0, %v2000
          %v2002 = vrcp.pop %v1950
          %v2003 = vmul.f32 1.0, %v2002
          %v2004 = vrcp.pop %v1951
          %v2005 = vmul.f32 1.0, %v2004
          %v2006 = vrcp.pop %v1952
          %v2007 = vmul.f32 1.0, %v2006
          %v2008 = vrcp.pop %v1953
          %v2009 = vmul.f32 1.0, %v2008
          %v2010 = vrcp.pop %v1954
          %v2011 = vmul.f32 1.0, %v2010
          %v2012 = vrcp.pop %v1955
          %v2013 = vmul.f32 1.0, %v2012
          %v2014 = vrcp.pop %v1956
          %v2015 = vmul.f32 1.0, %v2014
          %v2016 = vrcp.pop %v1957
          %v2017 = vmul.f32 1.0, %v2016
          %v2018 = vrcp.pop %v1958
          %v2019 = vmul.f32 1.0, %v2018
          %v2020 = vrcp.pop %v1959
          %v2021 = vmul.f32 1.0, %v2020
          %v2022 = vrcp.pop %v1960
          %v2023 = vmul.f32 1.0, %v2022
          %v2024 = vrcp.pop %v1961
          %v2025 = vmul.f32 1.0, %v2024
          %v2026 = vld [vmem:[%s6] sm:$0x1]
          %v2028 = vlaneseq
          %v2029 = vshrl.u32 %v2028, 7
          %v2030 = vsub.s32 0, %v2029
          %v2031 = vrot.slane %v2026, %v2030
          %v2033 = vmul.f32 %v1963, %v2031
          %v2034 = vmul.f32 %v1965, %v2031
          %v2035 = vmul.f32 %v1967, %v2031
          %v2036 = vmul.f32 %v1969, %v2031
          %v2037 = vmul.f32 %v1971, %v2031
          %v2038 = vmul.f32 %v1973, %v2031
          %v2039 = vmul.f32 %v1975, %v2031
          %v2040 = vmul.f32 %v1977, %v2031
          %v2041 = vmul.f32 %v1979, %v2031
          %v2042 = vmul.f32 %v1981, %v2031
          %v2043 = vmul.f32 %v1983, %v2031
          %v2044 = vmul.f32 %v1985, %v2031
          %v2045 = vmul.f32 %v1987, %v2031
          %v2046 = vmul.f32 %v1989, %v2031
          %v2047 = vmul.f32 %v1991, %v2031
          %v2048 = vmul.f32 %v1993, %v2031
          %v2049 = vmul.f32 %v1995, %v2031
          %v2050 = vmul.f32 %v1997, %v2031
          %v2051 = vmul.f32 %v1999, %v2031
          %v2052 = vmul.f32 %v2001, %v2031
          %v2053 = vmul.f32 %v2003, %v2031
          %v2054 = vmul.f32 %v2005, %v2031
          %v2055 = vmul.f32 %v2007, %v2031
          %v2056 = vmul.f32 %v2009, %v2031
          %v2057 = vmul.f32 %v2011, %v2031
          %v2058 = vmul.f32 %v2013, %v2031
          %v2059 = vmul.f32 %v2015, %v2031
          %v2060 = vmul.f32 %v2017, %v2031
          %v2061 = vmul.f32 %v2019, %v2031
          %v2062 = vmul.f32 %v2021, %v2031
          %v2063 = vmul.f32 %v2023, %v2031
          %v2064 = vmul.f32 %v2025, %v2031
          %2065 = vadd.xlane.f32.xlu0 %v2033
          %v2066 = vpop.xlane.xlu0 %2065
          %2067 = vadd.xlane.f32.xlu0 %v2034
          %v2068 = vpop.xlane.xlu0 %2067
          %2069 = vadd.xlane.f32.xlu0 %v2035
          %v2070 = vpop.xlane.xlu0 %2069
          %2071 = vadd.xlane.f32.xlu0 %v2036
          %v2072 = vpop.xlane.xlu0 %2071
          %2073 = vadd.xlane.f32.xlu0 %v2037
          %v2074 = vpop.xlane.xlu0 %2073
          %2075 = vadd.xlane.f32.xlu0 %v2038
          %v2076 = vpop.xlane.xlu0 %2075
          %2077 = vadd.xlane.f32.xlu0 %v2039
          %v2078 = vpop.xlane.xlu0 %2077
          %2079 = vadd.xlane.f32.xlu0 %v2040
          %v2080 = vpop.xlane.xlu0 %2079
          %2081 = vadd.xlane.f32.xlu0 %v2041
          %v2082 = vpop.xlane.xlu0 %2081
          %2083 = vadd.xlane.f32.xlu0 %v2042
          %v2084 = vpop.xlane.xlu0 %2083
          %2085 = vadd.xlane.f32.xlu0 %v2043
          %v2086 = vpop.xlane.xlu0 %2085
          %2087 = vadd.xlane.f32.xlu0 %v2044
          %v2088 = vpop.xlane.xlu0 %2087
          %2089 = vadd.xlane.f32.xlu0 %v2045
          %v2090 = vpop.xlane.xlu0 %2089
          %2091 = vadd.xlane.f32.xlu0 %v2046
          %v2092 = vpop.xlane.xlu0 %2091
          %2093 = vadd.xlane.f32.xlu0 %v2047
          %v2094 = vpop.xlane.xlu0 %2093
          %2095 = vadd.xlane.f32.xlu0 %v2048
          %v2096 = vpop.xlane.xlu0 %2095
          %2097 = vadd.xlane.f32.xlu0 %v2049
          %v2098 = vpop.xlane.xlu0 %2097
          %2099 = vadd.xlane.f32.xlu0 %v2050
          %v2100 = vpop.xlane.xlu0 %2099
          %2101 = vadd.xlane.f32.xlu0 %v2051
          %v2102 = vpop.xlane.xlu0 %2101
          %2103 = vadd.xlane.f32.xlu0 %v2052
          %v2104 = vpop.xlane.xlu0 %2103
          %2105 = vadd.xlane.f32.xlu0 %v2053
          %v2106 = vpop.xlane.xlu0 %2105
          %2107 = vadd.xlane.f32.xlu0 %v2054
          %v2108 = vpop.xlane.xlu0 %2107
          %2109 = vadd.xlane.f32.xlu0 %v2055
          %v2110 = vpop.xlane.xlu0 %2109
          %2111 = vadd.xlane.f32.xlu0 %v2056
          %v2112 = vpop.xlane.xlu0 %2111
          %2113 = vadd.xlane.f32.xlu0 %v2057
          %v2114 = vpop.xlane.xlu0 %2113
          %2115 = vadd.xlane.f32.xlu0 %v2058
          %v2116 = vpop.xlane.xlu0 %2115
          %2117 = vadd.xlane.f32.xlu0 %v2059
          %v2118 = vpop.xlane.xlu0 %2117
          %2119 = vadd.xlane.f32.xlu0 %v2060
          %v2120 = vpop.xlane.xlu0 %2119
          %2121 = vadd.xlane.f32.xlu0 %v2061
          %v2122 = vpop.xlane.xlu0 %2121
          %2123 = vadd.xlane.f32.xlu0 %v2062
          %v2124 = vpop.xlane.xlu0 %2123
          %2125 = vadd.xlane.f32.xlu0 %v2063
          %v2126 = vpop.xlane.xlu0 %2125
          %2127 = vadd.xlane.f32.xlu0 %v2064
          %v2128 = vpop.xlane.xlu0 %2127
          %v2129 = vld [vmem:[#allocation5] sm:$0xff]
          %v2130 = vmul.f32 %v1215, %v2066
          %v2131 = vmul.f32 %v1216, %v2068
          %v2132 = vmul.f32 %v1217, %v2070
          %v2133 = vmul.f32 %v1218, %v2072
          %v2134 = vmul.f32 %v1219, %v2074
          %v2135 = vmul.f32 %v1220, %v2076
          %v2136 = vmul.f32 %v1221, %v2078
          %v2137 = vmul.f32 %v1222, %v2080
          %v2138 = vmul.f32 %v1223, %v2082
          %v2139 = vmul.f32 %v1224, %v2084
          %v2140 = vmul.f32 %v1225, %v2086
          %v2141 = vmul.f32 %v1226, %v2088
          %v2142 = vmul.f32 %v1227, %v2090
          %v2143 = vmul.f32 %v1228, %v2092
          %v2144 = vmul.f32 %v1229, %v2094
          %v2145 = vmul.f32 %v1230, %v2096
          %v2146 = vmul.f32 %v1231, %v2098
          %v2147 = vmul.f32 %v1232, %v2100
          %v2148 = vmul.f32 %v1233, %v2102
          %v2149 = vmul.f32 %v1234, %v2104
          %v2150 = vmul.f32 %v1235, %v2106
          %v2151 = vmul.f32 %v1236, %v2108
          %v2152 = vmul.f32 %v1237, %v2110
          %v2153 = vmul.f32 %v1238, %v2112
          %v2154 = vmul.f32 %v1239, %v2114
          %v2155 = vmul.f32 %v1240, %v2116
          %v2156 = vmul.f32 %v1241, %v2118
          %v2157 = vmul.f32 %v1242, %v2120
          %v2158 = vmul.f32 %v1243, %v2122
          %v2159 = vmul.f32 %v1244, %v2124
          %v2160 = vmul.f32 %v1245, %v2126
          %v2161 = vmul.f32 %v1246, %v2128
          %v2162 = vpack.c.bf16 %v2131, %v2130
          %v2163 = vpack.c.bf16 %v2133, %v2132
          %v2164 = vpack.c.bf16 %v2135, %v2134
          %v2165 = vpack.c.bf16 %v2137, %v2136
          %v2166 = vpack.c.bf16 %v2139, %v2138
          %v2167 = vpack.c.bf16 %v2141, %v2140
          %v2168 = vpack.c.bf16 %v2143, %v2142
          %v2169 = vpack.c.bf16 %v2145, %v2144
          %v2170 = vpack.c.bf16 %v2147, %v2146
          %v2171 = vpack.c.bf16 %v2149, %v2148
          %v2172 = vpack.c.bf16 %v2151, %v2150
          %v2173 = vpack.c.bf16 %v2153, %v2152
          %v2174 = vpack.c.bf16 %v2155, %v2154
          %v2175 = vpack.c.bf16 %v2157, %v2156
          %v2176 = vpack.c.bf16 %v2159, %v2158
          %v2177 = vpack.c.bf16 %v2161, %v2160
          %2178 = vxpose.xlu0.c.b16.start [1/8] %v2162, 128
          %2179 = vxpose.xlu0.c.b16.cont [2/8] %v2163, 128
          %2180 = vxpose.xlu0.c.b16.cont [3/8] %v2164, 128
          %2181 = vxpose.xlu0.c.b16.cont [4/8] %v2165, 128
          %2182 = vxpose.xlu0.c.b16.cont [5/8] %v2166, 128
          %2183 = vxpose.xlu0.c.b16.cont [6/8] %v2167, 128
          %2184 = vxpose.xlu0.c.b16.cont [7/8] %v2168, 128
          %2185 = vxpose.xlu0.c.b16.end [8/8] %v2169, 128
          %v2186 = vpop.trf.xlu0
          %v2187 = vpop.trf.xlu0
          %v2188 = vpop.trf.xlu0
          %v2189 = vpop.trf.xlu0
          %v2190 = vpop.trf.xlu0
          %v2191 = vpop.trf.xlu0
          %v2192 = vpop.trf.xlu0
          %v2193 = vpop.trf.xlu0
          %2194 = vxpose.xlu0.c.b16.start [1/8] %v2170, 128
          %2195 = vxpose.xlu0.c.b16.cont [2/8] %v2171, 128
          %2196 = vxpose.xlu0.c.b16.cont [3/8] %v2172, 128
          %2197 = vxpose.xlu0.c.b16.cont [4/8] %v2173, 128
          %2198 = vxpose.xlu0.c.b16.cont [5/8] %v2174, 128
          %2199 = vxpose.xlu0.c.b16.cont [6/8] %v2175, 128
          %2200 = vxpose.xlu0.c.b16.cont [7/8] %v2176, 128
          %2201 = vxpose.xlu0.c.b16.end [8/8] %v2177, 128
          %v2202 = vpop.trf.xlu0
          %v2203 = vpop.trf.xlu0
          %v2204 = vpop.trf.xlu0
          %v2205 = vpop.trf.xlu0
          %v2206 = vpop.trf.xlu0
          %v2207 = vpop.trf.xlu0
          %v2208 = vpop.trf.xlu0
          %v2209 = vpop.trf.xlu0
          %2210 = vmatprep.subr.bf16.mxu0 0
          %2211 = vmatpush1.bf16.msra.mxu0 %v693
          %2212 = vmatprep.subr.bf16.mxu0 0
          %2213 = vmatpush1.bf16.msra.mxu0 %v694
          %2214 = vmatprep.subr.bf16.mxu0 0
          %2215 = vmatpush1.bf16.msra.mxu0 %v695
          %2216 = vmatprep.subr.bf16.mxu0 0
          %2217 = vmatpush1.bf16.msra.mxu0 %v696
          %2218 = vmatprep.subr.bf16.mxu0 0
          %2219 = vmatpush1.bf16.msra.mxu0 %v697
          %2220 = vmatprep.subr.bf16.mxu0 0
          %2221 = vmatpush1.bf16.msra.mxu0 %v698
          %2222 = vmatprep.subr.bf16.mxu0 0
          %2223 = vmatpush1.bf16.msra.mxu0 %v699
          %2224 = vmatprep.subr.bf16.mxu0 0
          %2225 = vmatpush1.bf16.msra.mxu0 %v700
          %2226 = vmatprep.subr.bf16.mxu0 0
          %2227 = vmatpush1.bf16.msra.mxu0 %v701
          %2228 = vmatprep.subr.bf16.mxu0 0
          %2229 = vmatpush1.bf16.msra.mxu0 %v702
          %2230 = vmatprep.subr.bf16.mxu0 0
          %2231 = vmatpush1.bf16.msra.mxu0 %v703
          %2232 = vmatprep.subr.bf16.mxu0 0
          %2233 = vmatpush1.bf16.msra.mxu0 %v704
          %2234 = vmatprep.subr.bf16.mxu0 0
          %2235 = vmatpush1.bf16.msra.mxu0 %v705
          %2236 = vmatprep.subr.bf16.mxu0 0
          %2237 = vmatpush1.bf16.msra.mxu0 %v706
          %2238 = vmatprep.subr.bf16.mxu0 0
          %2239 = vmatpush1.bf16.msra.mxu0 %v707
          %2240 = vmatprep.subr.bf16.mxu0 0
          %2241 = vmatpush1.bf16.msra.mxu0 %v708
          %2242 = vmatprep.mubr.bf16.mxu0 %v2202
          %2243 = vmatmul.mubr.bf16.gmra.mrb[0].mxu0 %v2186
          %v2244 = vpop.f32.mrb[0].mxu0
          %v2245 = vadd.f32 0.0, %v2244
          %v2246 = vpop.f32.mrb[0].mxu0
          %v2247 = vpop.f32.mrb[0].mxu0
          %v2248 = vpop.f32.mrb[0].mxu0
          %2249 = vdwg.mxu0
          %v2250 = vadd.f32 %v2129, %v2245
          %2251 = vst [vmem:[#allocation5] sm:$0xff] %v2250
        $region64: #{tpu_custom_call.1} parent=47 // pred_fallthru
          _
        // Predicated region
        $region69: #{tpu_custom_call.1} parent=47 // pred_check
          %p2252 = pneg %p201
        $region70: #{tpu_custom_call.1} parent=47 // pred_check_branch
          %2254 = sbr.rel (%p2252) target = $region72
        $region71: #{tpu_custom_call.1} parent=47 // pred_region
          %s2256 = ssub.s32 128, 128
          %2257 = vsyncadd [#allocation6], %s2256
          %s2259 = sshll.u32 [#allocation5], 4
          %s2260 = int_to_ptr.vmem [resolvable:$true] %s2259
          %2262 = dma.vmem_to_hbm [thread:$0]  %s2260, 128, %s7, [#allocation6]
        $region72: #{tpu_custom_call.1} parent=47 // pred_fallthru
          _
        // Predicated region
        $region73: #{tpu_custom_call.1} parent=47 // pred_check
          %p2263 = pneg %p201
        $region74: #{tpu_custom_call.1} parent=47 // pred_check_branch
          %2265 = sbr.rel (%p2263) target = $region76
        $region75: #{tpu_custom_call.1} parent=47 // pred_region
          %2266 = dma.done [#allocation6], 128
        $region76: #{tpu_custom_call.1} parent=47 // pred_fallthru
          _
      $region48: #{tpu_custom_call.1} parent=5 // pred_fallthru
        _
      %p2267 = scmp.le.s32.totalorder 2, %s14
      // Predicated region
      $region77: #{tpu_custom_call.1} parent=5 // pred_check
        %p2268 = pneg %p2267
      $region78: #{tpu_custom_call.1} parent=5 // pred_check_branch
        %2270 = sbr.rel (%p2268) target = $region80
      $region79: #{tpu_custom_call.1} parent=5 // pred_region
        %s2271 = ssub.s32 %s14, 2
      $region80: #{tpu_custom_call.1} parent=5 // pred_fallthru
        _
    $region6: #{tpu_custom_call.1} parent=1 // loop_footer
      %s18 = sadd.s32 1, %s14
    $region7: #{tpu_custom_call.1} parent=1 // loop_footer_branch
      %13 = sbr.rel target = $region3
    $region8: #{tpu_custom_call.1} parent=1 // loop_exit
      _
    %2272 = vsyncpa [#allocation6], 1
    %s2273 = scalar_lea.sflag [#allocation6], 1
    %2274 = vsyncpa %s2273, 1

</llo_original>
